<compile_context>
chip_gen: v6e
topology: v6e:2x2x1
jax: 0.10.0
libtpu: 0.0.40
codegen_flags: <defaults>
</compile_context>

<pallas_src>
import functools

import jax
import jax.numpy as jnp
from jax.experimental import pallas as pl
from jax.experimental.pallas import tpu as pltpu


def _round_up(a, m):
    return ((a + m - 1) // m) * m


def adf3_kernel(x_ref, w_ref, b_ref, o_ref, *, g):
    # x: (TNp, G*D)  packed rows (G original rows per packed row)
    # w: (G*D, 2*G)  block-diagonal packed weight, cols = [class0 x G | class1 x G]
    # b: (1, 2*G)    packed bias
    # o: (TNp, 2*G)  cols = [p0 x G | p1 x G]
    z = jnp.dot(x_ref[...], w_ref[...], preferred_element_type=jnp.float32)
    z = z + b_ref[...]

    # LeakyReLU (torch default negative_slope = 0.01)
    a = jnp.where(z > 0, z, 0.01 * z)

    # 2-way softmax via sigmoid identity; slices are 128-lane aligned (g = 128).
    a0 = a[:, :g]                       # class-0 activations
    a1 = a[:, g:]                       # class-1 activations
    p1 = 1.0 / (1.0 + jnp.exp(a0 - a1))  # = sigmoid(a1 - a0) = softmax[..., 1]
    o_ref[:, g:] = p1
    o_ref[:, :g] = 1.0 - p1             # exact complement -> rows sum to 1


def _adf3_xla(x, w_t, bias):
    """Plain-XLA path for tiny inputs / tail rows (< group rows). Same math."""
    z = x @ w_t + bias
    a = jnp.where(z > 0, z, 0.01 * z)
    p1 = 1.0 / (1.0 + jnp.exp(a[:, 0:1] - a[:, 1:2]))
    return jnp.concatenate([1.0 - p1, p1], axis=-1)


def adf3_forward(adf_in, weight, bias, *, group=128, tnp_max=128):
    """adf_in: (N, n_adf) f32; weight: (2, n_adf) f32 (torch layout); bias: (2,) f32."""
    N, D = adf_in.shape
    w_t = weight.T                                    # (D, 2)

    if N < group:
        # Not worth a kernel launch; < 128 rows.
        return _adf3_xla(adf_in, w_t, bias)

    G = group
    Np = N // G                                       # packed rows through kernel
    Nmain = Np * G
    tail = N - Nmain                                  # < G rows, handled in XLA

    # Pack G rows per VMEM row (metadata-only reshape for contiguous rows).
    x_main = adf_in if tail == 0 else adf_in[:Nmain]
    x_packed = x_main.reshape(Np, G * D)

    # Block-diagonal packed weight: w_packed[g*D + d, c*G + h] = W^T[d, c] * (g == h)
    eye = jnp.eye(G, dtype=w_t.dtype)
    w_packed = jnp.einsum("dc,gh->gdch", w_t, eye).reshape(G * D, 2 * G)
    b_packed = jnp.repeat(bias, G).reshape(1, 2 * G)

    # Packed-row tile: big (amortize per-step overhead), multiple of 8 sublanes,
    # and capped at ceil(Np/2) so the grid has >= 2 blocks when Np allows (v7x
    # has 2 TensorCores).
    tnp = min(tnp_max, max(8, _round_up(pl.cdiv(Np, 2), 8)))
    num_blocks = pl.cdiv(Np, tnp)

    out_packed = pl.pallas_call(
        functools.partial(adf3_kernel, g=G),
        out_shape=jax.ShapeDtypeStruct((Np, 2 * G), jnp.float32),
        grid_spec=pltpu.PrefetchScalarGridSpec(
            num_scalar_prefetch=0,
            grid=(num_blocks,),
            in_specs=[
                # x: tiled over packed rows -> pipelined, double-buffered DMA.
                pl.BlockSpec((tnp, G * D), lambda i: (i, 0)),
                # weight / bias: constant block index -> resident across grid.
                pl.BlockSpec((G * D, 2 * G), lambda i: (0, 0)),
                pl.BlockSpec((1, 2 * G), lambda i: (0, 0)),
            ],
            out_specs=pl.BlockSpec((tnp, 2 * G), lambda i: (i, 0)),
        ),
        compiler_params=pltpu.CompilerParams(
            dimension_semantics=("parallel",),
            vmem_limit_bytes=32 * 1024 * 1024,
        ),
    )(x_packed, w_packed, b_packed)

    # Unpack (Np, [p0 x G | p1 x G]) -> (Nmain, 2).  Tiny (N*2 floats) XLA
    # layout plumbing, not compute.
    out_main = out_packed.reshape(Np, 2, G).transpose(0, 2, 1).reshape(Nmain, 2)

    if tail:
        out_tail = _adf3_xla(adf_in[Nmain:], w_t, bias)
        return jnp.concatenate([out_main, out_tail], axis=0)
    return out_main


def adf3_reference(adf_in, weight, bias):
    z = adf_in @ weight.T + bias
    a = jnp.where(z > 0, z, 0.01 * z)
    return jax.nn.softmax(a, axis=1)


if __name__ == "__main__":
    key = jax.random.PRNGKey(0)
    k_w, k_b, k_x1, k_x2 = jax.random.split(key, 4)

    n_adf = 32  # input feature dim

    # Deterministic params mimicking torch Linear's uniform(-1/sqrt(fan_in), ...)
    bound = 1.0 / float(n_adf) ** 0.5
    weight = jax.random.uniform(k_w, (2, n_adf), minval=-bound, maxval=bound,
                                dtype=jnp.float32)
    bias = jax.random.uniform(k_b, (2,), minval=-bound, maxval=bound,
                              dtype=jnp.float32)

    # 256 rows: pure kernel path; 200 rows: kernel (128 rows) + XLA tail (72).
    for n_cells, kx in ((256, k_x1), (200, k_x2)):
        adf_in = jax.random.normal(kx, (n_cells, n_adf), dtype=jnp.float32)

        out = jax.block_until_ready(adf3_forward(adf_in, weight, bias))
        ref = adf3_reference(adf_in, weight, bias)

        assert out.shape == (n_cells, 2)
        # 2e-3 covers default-precision MXU matmul differences vs the XLA ref.
        assert bool(jnp.allclose(out, ref, atol=2e-3, rtol=2e-3)), "mismatch vs reference"
        # Sigmoid formulation -> rows sum to 1 to fp rounding.
        assert bool(jnp.allclose(jnp.sum(out, axis=1), 1.0, atol=1e-5)), \
            "softmax rows must sum to ~1"

    print("KERNEL_OK")
</pallas_src>

<mosaic_0001>
module attributes {stable_mosaic.version = 11 : i64} {
  func.func @adf3_kernel(%arg0: i32, %arg1: memref<8x4096xf32, #tpu.memory_space<vmem>>, %arg2: memref<4096x256xf32, #tpu.memory_space<vmem>>, %arg3: memref<1x256xf32, #tpu.memory_space<vmem>>, %arg4: memref<8x256xf32, #tpu.memory_space<vmem>>) attributes {dimension_semantics = [#tpu.dimension_semantics<parallel>], iteration_bounds = array<i64: 1>, scalar_prefetch = 0 : i64, scratch_operands = 0 : i64, tpu.core_type = #tpu.core_type<tc>, window_params = [{transform_indices = @transform_0, window_bounds = array<i64: 8, 4096>}, {pipeline_mode = #tpu.pipeline_mode<synchronous>, transform_indices = @transform_1, window_bounds = array<i64: 4096, 256>}, {pipeline_mode = #tpu.pipeline_mode<synchronous>, transform_indices = @transform_2, window_bounds = array<i64: 1, 256>}, {transform_indices = @transform_3, window_bounds = array<i64: 8, 256>}]} {
    %c0 = arith.constant 0 : index
    %c0_0 = arith.constant 0 : index
    %0 = vector.load %arg1[%c0, %c0_0] : memref<8x4096xf32, #tpu.memory_space<vmem>>, vector<8x4096xf32>
    %c0_1 = arith.constant 0 : index
    %c0_2 = arith.constant 0 : index
    %1 = vector.load %arg2[%c0_1, %c0_2] : memref<4096x256xf32, #tpu.memory_space<vmem>>, vector<4096x256xf32>
    %cst = arith.constant dense<0.000000e+00> : vector<8x256xf32>
    %2 = tpu.matmul %0, %1, %cst {dimension_numbers = #tpu.dot_dimension_numbers<[1], [0], [0], [1], [0, 0, 1, 1], [], []>} : vector<8x4096xf32>, vector<4096x256xf32>, vector<8x256xf32> -> vector<8x256xf32>
    %c0_3 = arith.constant 0 : index
    %c0_4 = arith.constant 0 : index
    %3 = vector.load %arg3[%c0_3, %c0_4] : memref<1x256xf32, #tpu.memory_space<vmem>>, vector<1x256xf32>
    %4 = vector.broadcast %3 : vector<1x256xf32> to vector<8x256xf32>
    %5 = arith.addf %2, %4 : vector<8x256xf32>
    %cst_5 = arith.constant 0.000000e+00 : f32
    %6 = vector.broadcast %cst_5 : f32 to vector<8x256xf32>
    %7 = arith.cmpf ogt, %5, %6 : vector<8x256xf32>
    %cst_6 = arith.constant 0.00999999977 : f32
    %8 = vector.broadcast %cst_6 : f32 to vector<8x256xf32>
    %9 = arith.mulf %8, %5 : vector<8x256xf32>
    %10 = arith.select %7, %5, %9 : vector<8x256xi1>, vector<8x256xf32>
    %11 = vector.extract_strided_slice %10 {offsets = [0, 0], sizes = [8, 128], strides = [1, 1]} : vector<8x256xf32> to vector<8x128xf32>
    %12 = vector.extract_strided_slice %10 {offsets = [0, 128], sizes = [8, 128], strides = [1, 1]} : vector<8x256xf32> to vector<8x128xf32>
    %13 = arith.subf %11, %12 : vector<8x128xf32>
    %14 = math.exp %13 : vector<8x128xf32>
    %cst_7 = arith.constant 1.000000e+00 : f32
    %15 = vector.broadcast %cst_7 : f32 to vector<8x128xf32>
    %16 = arith.addf %15, %14 : vector<8x128xf32>
    %cst_8 = arith.constant 1.000000e+00 : f32
    %17 = vector.broadcast %cst_8 : f32 to vector<8x128xf32>
    %18 = arith.divf %17, %16 : vector<8x128xf32>
    %c0_9 = arith.constant 0 : index
    %c128 = arith.constant 128 : index
    %19 = vector.load %arg4[%c0_9, %c128] : memref<8x256xf32, #tpu.memory_space<vmem>>, vector<8x128xf32>
    tpu.vector_store %arg4[%c0_9, %c128], %18 {strides = array<i32>} : memref<8x256xf32, #tpu.memory_space<vmem>>, vector<8x128xf32>,
    %cst_10 = arith.constant 1.000000e+00 : f32
    %20 = vector.broadcast %cst_10 : f32 to vector<8x128xf32>
    %21 = arith.subf %20, %18 : vector<8x128xf32>
    %c0_11 = arith.constant 0 : index
    %c0_12 = arith.constant 0 : index
    %22 = vector.load %arg4[%c0_11, %c0_12] : memref<8x256xf32, #tpu.memory_space<vmem>>, vector<8x128xf32>
    tpu.vector_store %arg4[%c0_11, %c0_12], %21 {strides = array<i32>} : memref<8x256xf32, #tpu.memory_space<vmem>>, vector<8x128xf32>,
    return
  }
  func.func @transform_0(%arg0: i32) -> (i32, i32) {
    %c0_i32 = arith.constant 0 : i32
    %c0_i32_0 = arith.constant 0 : i32
    return %arg0, %c0_i32 : i32, i32
  }
  func.func @transform_1(%arg0: i32) -> (i32, i32) {
    %c0_i32 = arith.constant 0 : i32
    %c0_i32_0 = arith.constant 0 : i32
    %c0_i32_1 = arith.constant 0 : i32
    return %c0_i32, %c0_i32_0 : i32, i32
  }
  func.func @transform_2(%arg0: i32) -> (i32, i32) {
    %c0_i32 = arith.constant 0 : i32
    %c0_i32_0 = arith.constant 0 : i32
    %c0_i32_1 = arith.constant 0 : i32
    return %c0_i32, %c0_i32_0 : i32, i32
  }
  func.func @transform_3(%arg0: i32) -> (i32, i32) {
    %c0_i32 = arith.constant 0 : i32
    %c0_i32_0 = arith.constant 0 : i32
    return %arg0, %c0_i32 : i32, i32
  }
}

</mosaic_0001>

<llo_original>
// kernel: tpu_custom_call.1
$region0: #{tpu_custom_call.1}
  #allocation0 [shape = 'u32[]', space=smem, size = 0x4, offset = 0x4, fixed_abs, tag = 'smem constant byte address 0x4 - core index']
  #allocation1 [shape = 'u32[144,128]{1,0:T(1,128)}', space=vmem, size = 0x12000, scoped, tag = 'internal scratch']
  %s0 = inlined_call_operand.hbm [shape: f32[2,4096], index: 0, kind: input, shape index: {}]
  %s1 = inlined_call_operand.hbm [shape: f32[4096,256], index: 1, kind: input, shape index: {}]
  %s2 = inlined_call_operand.hbm [shape: f32[1,256], index: 2, kind: input, shape index: {}]
  %s3 = inlined_call_operand.hbm [shape: f32[2,256], index: 3, kind: output, shape index: {}]
  %s4 = sld [smem:[#allocation0]]
  $region34: #{tpu_custom_call.1} parent=0
    _
  %s6 = ssub.s32 1, %s4
  %s7 = scalar_select 0, %s6, %s4
  $region1: #{tpu_custom_call.1} parent=0
    #allocation2 [shape = 'u8[131072]{0}', space=vmem, size = 0x20000, scoped, tag = 'input window, operand 0, single buffered']
    #allocation3 [shape = 's32[1]{0}', space=sflag, size = 0x4, scoped, tag = 'scoped memory for tpu_custom_call.1']
    #allocation4 [shape = 's32[1]{0}', space=sflag, size = 0x4, scoped, tag = 'scoped memory for tpu_custom_call.1']
    #allocation5 [shape = 'u8[4194304]{0}', space=vmem, size = 0x400000, scoped, tag = 'input window, operand 1, single buffered']
    #allocation6 [shape = 's32[1]{0}', space=sflag, size = 0x4, scoped, tag = 'scoped memory for tpu_custom_call.1']
    #allocation7 [shape = 'u8[1024]{0}', space=vmem, size = 0x400, scoped, tag = 'input window, operand 2, single buffered']
    #allocation8 [shape = 'u8[8192]{0}', space=vmem, size = 0x2000, scoped, tag = 'output window, operand 0, single buffered']
    %8 = vsyncpa [#allocation3], 0
    %9 = vsyncpa [#allocation6], 0
    %10 = vsyncpa [#allocation4], 0
    // Predicated region
    $region2: #{tpu_custom_call.1} parent=1 // pred_check
      _
    $region3: #{tpu_custom_call.1} parent=1 // pred_check_branch
      %12 = sbr.rel (0) target = $region5
    $region4: #{tpu_custom_call.1} parent=1 // pred_region
      %s14 = ssub.s32 4096, 1024
      %15 = vsyncadd [#allocation3], %s14
      %s16 = sshll.u32 [#allocation2], 4
      %s17 = int_to_ptr.vmem [resolvable:$true] %s16
      %22 = dma.hbm_to_vmem [thread:$0]  %s0, 1024, %s17, [#allocation3], 1024, 1024, 64
    $region5: #{tpu_custom_call.1} parent=1 // pred_fallthru
      _
    // Predicated region
    $region6: #{tpu_custom_call.1} parent=1 // pred_check
      _
    $region7: #{tpu_custom_call.1} parent=1 // pred_check_branch
      %24 = sbr.rel (0) target = $region9
    $region8: #{tpu_custom_call.1} parent=1 // pred_region
      %s26 = ssub.s32 131072, 131072
      %27 = vsyncadd [#allocation6], %s26
      %s28 = sshll.u32 [#allocation5], 4
      %s29 = int_to_ptr.vmem [resolvable:$true] %s28
      %34 = dma.hbm_to_vmem [thread:$0]  %s1, 131072, %s29, [#allocation6], 256, 256, 16
    $region9: #{tpu_custom_call.1} parent=1 // pred_fallthru
      _
    // Predicated region
    $region10: #{tpu_custom_call.1} parent=1 // pred_check
      _
    $region11: #{tpu_custom_call.1} parent=1 // pred_check_branch
      %36 = sbr.rel (0) target = $region13
    $region12: #{tpu_custom_call.1} parent=1 // pred_region
      %s38 = ssub.s32 32, 32
      %39 = vsyncadd [#allocation6], %s38
      %s41 = sshll.u32 [#allocation7], 4
      %s42 = int_to_ptr.vmem [resolvable:$true] %s41
      %44 = dma.hbm_to_vmem [thread:$0]  %s2, 32, %s42, [#allocation6]
    $region13: #{tpu_custom_call.1} parent=1 // pred_fallthru
      _
    // Predicated region
    $region14: #{tpu_custom_call.1} parent=1 // pred_check
      _
    $region15: #{tpu_custom_call.1} parent=1 // pred_check_branch
      %46 = sbr.rel (0) target = $region17
    $region16: #{tpu_custom_call.1} parent=1 // pred_region
      %47 = dma.done [#allocation3], 4096
    $region17: #{tpu_custom_call.1} parent=1 // pred_fallthru
      _
    // Predicated region
    $region18: #{tpu_custom_call.1} parent=1 // pred_check
      _
    $region19: #{tpu_custom_call.1} parent=1 // pred_check_branch
      %49 = sbr.rel (0) target = $region21
    $region20: #{tpu_custom_call.1} parent=1 // pred_region
      %50 = dma.done [#allocation6], 131072
    $region21: #{tpu_custom_call.1} parent=1 // pred_fallthru
      _
    // Predicated region
    $region22: #{tpu_custom_call.1} parent=1 // pred_check
      _
    $region23: #{tpu_custom_call.1} parent=1 // pred_check_branch
      %52 = sbr.rel (0) target = $region25
    $region24: #{tpu_custom_call.1} parent=1 // pred_region
      %53 = dma.done [#allocation6], 32
    $region25: #{tpu_custom_call.1} parent=1 // pred_fallthru
      _
    %v54 = vld [vmem:[#allocation2] sm:$0xff]
    %v55 = vld [vmem:[#allocation2 + $0x8] sm:$0xff]
    %v56 = vld [vmem:[#allocation2 + $0x10] sm:$0xff]
    %v57 = vld [vmem:[#allocation2 + $0x18] sm:$0xff]
    %v58 = vld [vmem:[#allocation2 + $0x20] sm:$0xff]
    %v59 = vld [vmem:[#allocation2 + $0x28] sm:$0xff]
    %v60 = vld [vmem:[#allocation2 + $0x30] sm:$0xff]
    %v61 = vld [vmem:[#allocation2 + $0x38] sm:$0xff]
    %v62 = vld [vmem:[#allocation2 + $0x40] sm:$0xff]
    %v63 = vld [vmem:[#allocation2 + $0x48] sm:$0xff]
    %v64 = vld [vmem:[#allocation2 + $0x50] sm:$0xff]
    %v65 = vld [vmem:[#allocation2 + $0x58] sm:$0xff]
    %v66 = vld [vmem:[#allocation2 + $0x60] sm:$0xff]
    %v67 = vld [vmem:[#allocation2 + $0x68] sm:$0xff]
    %v68 = vld [vmem:[#allocation2 + $0x70] sm:$0xff]
    %v69 = vld [vmem:[#allocation2 + $0x78] sm:$0xff]
    %v70 = vld [vmem:[#allocation2 + $0x80] sm:$0xff]
    %v71 = vld [vmem:[#allocation2 + $0x88] sm:$0xff]
    %v72 = vld [vmem:[#allocation2 + $0x90] sm:$0xff]
    %v73 = vld [vmem:[#allocation2 + $0x98] sm:$0xff]
    %v74 = vld [vmem:[#allocation2 + $0xa0] sm:$0xff]
    %v75 = vld [vmem:[#allocation2 + $0xa8] sm:$0xff]
    %v76 = vld [vmem:[#allocation2 + $0xb0] sm:$0xff]
    %v77 = vld [vmem:[#allocation2 + $0xb8] sm:$0xff]
    %v78 = vld [vmem:[#allocation2 + $0xc0] sm:$0xff]
    %v79 = vld [vmem:[#allocation2 + $0xc8] sm:$0xff]
    %v80 = vld [vmem:[#allocation2 + $0xd0] sm:$0xff]
    %v81 = vld [vmem:[#allocation2 + $0xd8] sm:$0xff]
    %v82 = vld [vmem:[#allocation2 + $0xe0] sm:$0xff]
    %v83 = vld [vmem:[#allocation2 + $0xe8] sm:$0xff]
    %v84 = vld [vmem:[#allocation2 + $0xf0] sm:$0xff]
    %v85 = vld [vmem:[#allocation2 + $0xf8] sm:$0xff]
    %v86 = vld [vmem:[#allocation5] sm:$0xff]
    %v87 = vld [vmem:[#allocation5 + $0x8] sm:$0xff]
    %v88 = vld [vmem:[#allocation5 + $0x10] sm:$0xff]
    %v89 = vld [vmem:[#allocation5 + $0x18] sm:$0xff]
    %v90 = vld [vmem:[#allocation5 + $0x20] sm:$0xff]
    %v91 = vld [vmem:[#allocation5 + $0x28] sm:$0xff]
    %v92 = vld [vmem:[#allocation5 + $0x30] sm:$0xff]
    %v93 = vld [vmem:[#allocation5 + $0x38] sm:$0xff]
    %v94 = vld [vmem:[#allocation5 + $0x40] sm:$0xff]
    %v95 = vld [vmem:[#allocation5 + $0x48] sm:$0xff]
    %v96 = vld [vmem:[#allocation5 + $0x50] sm:$0xff]
    %v97 = vld [vmem:[#allocation5 + $0x58] sm:$0xff]
    %v98 = vld [vmem:[#allocation5 + $0x60] sm:$0xff]
    %v99 = vld [vmem:[#allocation5 + $0x68] sm:$0xff]
    %v100 = vld [vmem:[#allocation5 + $0x70] sm:$0xff]
    %v101 = vld [vmem:[#allocation5 + $0x78] sm:$0xff]
    %v102 = vld [vmem:[#allocation5 + $0x80] sm:$0xff]
    %v103 = vld [vmem:[#allocation5 + $0x88] sm:$0xff]
    %v104 = vld [vmem:[#allocation5 + $0x90] sm:$0xff]
    %v105 = vld [vmem:[#allocation5 + $0x98] sm:$0xff]
    %v106 = vld [vmem:[#allocation5 + $0xa0] sm:$0xff]
    %v107 = vld [vmem:[#allocation5 + $0xa8] sm:$0xff]
    %v108 = vld [vmem:[#allocation5 + $0xb0] sm:$0xff]
    %v109 = vld [vmem:[#allocation5 + $0xb8] sm:$0xff]
    %v110 = vld [vmem:[#allocation5 + $0xc0] sm:$0xff]
    %v111 = vld [vmem:[#allocation5 + $0xc8] sm:$0xff]
    %v112 = vld [vmem:[#allocation5 + $0xd0] sm:$0xff]
    %v113 = vld [vmem:[#allocation5 + $0xd8] sm:$0xff]
    %v114 = vld [vmem:[#allocation5 + $0xe0] sm:$0xff]
    %v115 = vld [vmem:[#allocation5 + $0xe8] sm:$0xff]
    %v116 = vld [vmem:[#allocation5 + $0xf0] sm:$0xff]
    %v117 = vld [vmem:[#allocation5 + $0xf8] sm:$0xff]
    %v118 = vld [vmem:[#allocation5 + $0x100] sm:$0xff]
    %v119 = vld [vmem:[#allocation5 + $0x108] sm:$0xff]
    %v120 = vld [vmem:[#allocation5 + $0x110] sm:$0xff]
    %v121 = vld [vmem:[#allocation5 + $0x118] sm:$0xff]
    %v122 = vld [vmem:[#allocation5 + $0x120] sm:$0xff]
    %v123 = vld [vmem:[#allocation5 + $0x128] sm:$0xff]
    %v124 = vld [vmem:[#allocation5 + $0x130] sm:$0xff]
    %v125 = vld [vmem:[#allocation5 + $0x138] sm:$0xff]
    %v126 = vld [vmem:[#allocation5 + $0x140] sm:$0xff]
    %v127 = vld [vmem:[#allocation5 + $0x148] sm:$0xff]
    %v128 = vld [vmem:[#allocation5 + $0x150] sm:$0xff]
    %v129 = vld [vmem:[#allocation5 + $0x158] sm:$0xff]
    %v130 = vld [vmem:[#allocation5 + $0x160] sm:$0xff]
    %v131 = vld [vmem:[#allocation5 + $0x168] sm:$0xff]
    %v132 = vld [vmem:[#allocation5 + $0x170] sm:$0xff]
    %v133 = vld [vmem:[#allocation5 + $0x178] sm:$0xff]
    %v134 = vld [vmem:[#allocation5 + $0x180] sm:$0xff]
    %v135 = vld [vmem:[#allocation5 + $0x188] sm:$0xff]
    %v136 = vld [vmem:[#allocation5 + $0x190] sm:$0xff]
    %v137 = vld [vmem:[#allocation5 + $0x198] sm:$0xff]
    %v138 = vld [vmem:[#allocation5 + $0x1a0] sm:$0xff]
    %v139 = vld [vmem:[#allocation5 + $0x1a8] sm:$0xff]
    %v140 = vld [vmem:[#allocation5 + $0x1b0] sm:$0xff]
    %v141 = vld [vmem:[#allocation5 + $0x1b8] sm:$0xff]
    %v142 = vld [vmem:[#allocation5 + $0x1c0] sm:$0xff]
    %v143 = vld [vmem:[#allocation5 + $0x1c8] sm:$0xff]
    %v144 = vld [vmem:[#allocation5 + $0x1d0] sm:$0xff]
    %v145 = vld [vmem:[#allocation5 + $0x1d8] sm:$0xff]
    %v146 = vld [vmem:[#allocation5 + $0x1e0] sm:$0xff]
    %v147 = vld [vmem:[#allocation5 + $0x1e8] sm:$0xff]
    %v148 = vld [vmem:[#allocation5 + $0x1f0] sm:$0xff]
    %v149 = vld [vmem:[#allocation5 + $0x1f8] sm:$0xff]
    %v150 = vld [vmem:[#allocation5 + $0x200] sm:$0xff]
    %v151 = vld [vmem:[#allocation5 + $0x208] sm:$0xff]
    %v152 = vld [vmem:[#allocation5 + $0x210] sm:$0xff]
    %v153 = vld [vmem:[#allocation5 + $0x218] sm:$0xff]
    %v154 = vld [vmem:[#allocation5 + $0x220] sm:$0xff]
    %v155 = vld [vmem:[#allocation5 + $0x228] sm:$0xff]
    %v156 = vld [vmem:[#allocation5 + $0x230] sm:$0xff]
    %v157 = vld [vmem:[#allocation5 + $0x238] sm:$0xff]
    %v158 = vld [vmem:[#allocation5 + $0x240] sm:$0xff]
    %v159 = vld [vmem:[#allocation5 + $0x248] sm:$0xff]
    %v160 = vld [vmem:[#allocation5 + $0x250] sm:$0xff]
    %v161 = vld [vmem:[#allocation5 + $0x258] sm:$0xff]
    %v162 = vld [vmem:[#allocation5 + $0x260] sm:$0xff]
    %v163 = vld [vmem:[#allocation5 + $0x268] sm:$0xff]
    %v164 = vld [vmem:[#allocation5 + $0x270] sm:$0xff]
    %v165 = vld [vmem:[#allocation5 + $0x278] sm:$0xff]
    %v166 = vld [vmem:[#allocation5 + $0x280] sm:$0xff]
    %v167 = vld [vmem:[#allocation5 + $0x288] sm:$0xff]
    %v168 = vld [vmem:[#allocation5 + $0x290] sm:$0xff]
    %v169 = vld [vmem:[#allocation5 + $0x298] sm:$0xff]
    %v170 = vld [vmem:[#allocation5 + $0x2a0] sm:$0xff]
    %v171 = vld [vmem:[#allocation5 + $0x2a8] sm:$0xff]
    %v172 = vld [vmem:[#allocation5 + $0x2b0] sm:$0xff]
    %v173 = vld [vmem:[#allocation5 + $0x2b8] sm:$0xff]
    %v174 = vld [vmem:[#allocation5 + $0x2c0] sm:$0xff]
    %v175 = vld [vmem:[#allocation5 + $0x2c8] sm:$0xff]
    %v176 = vld [vmem:[#allocation5 + $0x2d0] sm:$0xff]
    %v177 = vld [vmem:[#allocation5 + $0x2d8] sm:$0xff]
    %v178 = vld [vmem:[#allocation5 + $0x2e0] sm:$0xff]
    %v179 = vld [vmem:[#allocation5 + $0x2e8] sm:$0xff]
    %v180 = vld [vmem:[#allocation5 + $0x2f0] sm:$0xff]
    %v181 = vld [vmem:[#allocation5 + $0x2f8] sm:$0xff]
    %v182 = vld [vmem:[#allocation5 + $0x300] sm:$0xff]
    %v183 = vld [vmem:[#allocation5 + $0x308] sm:$0xff]
    %v184 = vld [vmem:[#allocation5 + $0x310] sm:$0xff]
    %v185 = vld [vmem:[#allocation5 + $0x318] sm:$0xff]
    %v186 = vld [vmem:[#allocation5 + $0x320] sm:$0xff]
    %v187 = vld [vmem:[#allocation5 + $0x328] sm:$0xff]
    %v188 = vld [vmem:[#allocation5 + $0x330] sm:$0xff]
    %v189 = vld [vmem:[#allocation5 + $0x338] sm:$0xff]
    %v190 = vld [vmem:[#allocation5 + $0x340] sm:$0xff]
    %v191 = vld [vmem:[#allocation5 + $0x348] sm:$0xff]
    %v192 = vld [vmem:[#allocation5 + $0x350] sm:$0xff]
    %v193 = vld [vmem:[#allocation5 + $0x358] sm:$0xff]
    %v194 = vld [vmem:[#allocation5 + $0x360] sm:$0xff]
    %v195 = vld [vmem:[#allocation5 + $0x368] sm:$0xff]
    %v196 = vld [vmem:[#allocation5 + $0x370] sm:$0xff]
    %v197 = vld [vmem:[#allocation5 + $0x378] sm:$0xff]
    %v198 = vld [vmem:[#allocation5 + $0x380] sm:$0xff]
    %v199 = vld [vmem:[#allocation5 + $0x388] sm:$0xff]
    %v200 = vld [vmem:[#allocation5 + $0x390] sm:$0xff]
    %v201 = vld [vmem:[#allocation5 + $0x398] sm:$0xff]
    %v202 = vld [vmem:[#allocation5 + $0x3a0] sm:$0xff]
    %v203 = vld [vmem:[#allocation5 + $0x3a8] sm:$0xff]
    %v204 = vld [vmem:[#allocation5 + $0x3b0] sm:$0xff]
    %v205 = vld [vmem:[#allocation5 + $0x3b8] sm:$0xff]
    %v206 = vld [vmem:[#allocation5 + $0x3c0] sm:$0xff]
    %v207 = vld [vmem:[#allocation5 + $0x3c8] sm:$0xff]
    %v208 = vld [vmem:[#allocation5 + $0x3d0] sm:$0xff]
    %v209 = vld [vmem:[#allocation5 + $0x3d8] sm:$0xff]
    %v210 = vld [vmem:[#allocation5 + $0x3e0] sm:$0xff]
    %v211 = vld [vmem:[#allocation5 + $0x3e8] sm:$0xff]
    %v212 = vld [vmem:[#allocation5 + $0x3f0] sm:$0xff]
    %v213 = vld [vmem:[#allocation5 + $0x3f8] sm:$0xff]
    %v214 = vld [vmem:[#allocation5 + $0x400] sm:$0xff]
    %v215 = vld [vmem:[#allocation5 + $0x408] sm:$0xff]
    %v216 = vld [vmem:[#allocation5 + $0x410] sm:$0xff]
    %v217 = vld [vmem:[#allocation5 + $0x418] sm:$0xff]
    %v218 = vld [vmem:[#allocation5 + $0x420] sm:$0xff]
    %v219 = vld [vmem:[#allocation5 + $0x428] sm:$0xff]
    %v220 = vld [vmem:[#allocation5 + $0x430] sm:$0xff]
    %v221 = vld [vmem:[#allocation5 + $0x438] sm:$0xff]
    %v222 = vld [vmem:[#allocation5 + $0x440] sm:$0xff]
    %v223 = vld [vmem:[#allocation5 + $0x448] sm:$0xff]
    %v224 = vld [vmem:[#allocation5 + $0x450] sm:$0xff]
    %v225 = vld [vmem:[#allocation5 + $0x458] sm:$0xff]
    %v226 = vld [vmem:[#allocation5 + $0x460] sm:$0xff]
    %v227 = vld [vmem:[#allocation5 + $0x468] sm:$0xff]
    %v228 = vld [vmem:[#allocation5 + $0x470] sm:$0xff]
    %v229 = vld [vmem:[#allocation5 + $0x478] sm:$0xff]
    %v230 = vld [vmem:[#allocation5 + $0x480] sm:$0xff]
    %v231 = vld [vmem:[#allocation5 + $0x488] sm:$0xff]
    %v232 = vld [vmem:[#allocation5 + $0x490] sm:$0xff]
    %v233 = vld [vmem:[#allocation5 + $0x498] sm:$0xff]
    %v234 = vld [vmem:[#allocation5 + $0x4a0] sm:$0xff]
    %v235 = vld [vmem:[#allocation5 + $0x4a8] sm:$0xff]
    %v236 = vld [vmem:[#allocation5 + $0x4b0] sm:$0xff]
    %v237 = vld [vmem:[#allocation5 + $0x4b8] sm:$0xff]
    %v238 = vld [vmem:[#allocation5 + $0x4c0] sm:$0xff]
    %v239 = vld [vmem:[#allocation5 + $0x4c8] sm:$0xff]
    %v240 = vld [vmem:[#allocation5 + $0x4d0] sm:$0xff]
    %v241 = vld [vmem:[#allocation5 + $0x4d8] sm:$0xff]
    %v242 = vld [vmem:[#allocation5 + $0x4e0] sm:$0xff]
    %v243 = vld [vmem:[#allocation5 + $0x4e8] sm:$0xff]
    %v244 = vld [vmem:[#allocation5 + $0x4f0] sm:$0xff]
    %v245 = vld [vmem:[#allocation5 + $0x4f8] sm:$0xff]
    %v246 = vld [vmem:[#allocation5 + $0x500] sm:$0xff]
    %v247 = vld [vmem:[#allocation5 + $0x508] sm:$0xff]
    %v248 = vld [vmem:[#allocation5 + $0x510] sm:$0xff]
    %v249 = vld [vmem:[#allocation5 + $0x518] sm:$0xff]
    %v250 = vld [vmem:[#allocation5 + $0x520] sm:$0xff]
    %v251 = vld [vmem:[#allocation5 + $0x528] sm:$0xff]
    %v252 = vld [vmem:[#allocation5 + $0x530] sm:$0xff]
    %v253 = vld [vmem:[#allocation5 + $0x538] sm:$0xff]
    %v254 = vld [vmem:[#allocation5 + $0x540] sm:$0xff]
    %v255 = vld [vmem:[#allocation5 + $0x548] sm:$0xff]
    %v256 = vld [vmem:[#allocation5 + $0x550] sm:$0xff]
    %v257 = vld [vmem:[#allocation5 + $0x558] sm:$0xff]
    %v258 = vld [vmem:[#allocation5 + $0x560] sm:$0xff]
    %v259 = vld [vmem:[#allocation5 + $0x568] sm:$0xff]
    %v260 = vld [vmem:[#allocation5 + $0x570] sm:$0xff]
    %v261 = vld [vmem:[#allocation5 + $0x578] sm:$0xff]
    %v262 = vld [vmem:[#allocation5 + $0x580] sm:$0xff]
    %v263 = vld [vmem:[#allocation5 + $0x588] sm:$0xff]
    %v264 = vld [vmem:[#allocation5 + $0x590] sm:$0xff]
    %v265 = vld [vmem:[#allocation5 + $0x598] sm:$0xff]
    %v266 = vld [vmem:[#allocation5 + $0x5a0] sm:$0xff]
    %v267 = vld [vmem:[#allocation5 + $0x5a8] sm:$0xff]
    %v268 = vld [vmem:[#allocation5 + $0x5b0] sm:$0xff]
    %v269 = vld [vmem:[#allocation5 + $0x5b8] sm:$0xff]
    %v270 = vld [vmem:[#allocation5 + $0x5c0] sm:$0xff]
    %v271 = vld [vmem:[#allocation5 + $0x5c8] sm:$0xff]
    %v272 = vld [vmem:[#allocation5 + $0x5d0] sm:$0xff]
    %v273 = vld [vmem:[#allocation5 + $0x5d8] sm:$0xff]
    %v274 = vld [vmem:[#allocation5 + $0x5e0] sm:$0xff]
    %v275 = vld [vmem:[#allocation5 + $0x5e8] sm:$0xff]
    %v276 = vld [vmem:[#allocation5 + $0x5f0] sm:$0xff]
    %v277 = vld [vmem:[#allocation5 + $0x5f8] sm:$0xff]
    %v278 = vld [vmem:[#allocation5 + $0x600] sm:$0xff]
    %v279 = vld [vmem:[#allocation5 + $0x608] sm:$0xff]
    %v280 = vld [vmem:[#allocation5 + $0x610] sm:$0xff]
    %v281 = vld [vmem:[#allocation5 + $0x618] sm:$0xff]
    %v282 = vld [vmem:[#allocation5 + $0x620] sm:$0xff]
    %v283 = vld [vmem:[#allocation5 + $0x628] sm:$0xff]
    %v284 = vld [vmem:[#allocation5 + $0x630] sm:$0xff]
    %v285 = vld [vmem:[#allocation5 + $0x638] sm:$0xff]
    %v286 = vld [vmem:[#allocation5 + $0x640] sm:$0xff]
    %v287 = vld [vmem:[#allocation5 + $0x648] sm:$0xff]
    %v288 = vld [vmem:[#allocation5 + $0x650] sm:$0xff]
    %v289 = vld [vmem:[#allocation5 + $0x658] sm:$0xff]
    %v290 = vld [vmem:[#allocation5 + $0x660] sm:$0xff]
    %v291 = vld [vmem:[#allocation5 + $0x668] sm:$0xff]
    %v292 = vld [vmem:[#allocation5 + $0x670] sm:$0xff]
    %v293 = vld [vmem:[#allocation5 + $0x678] sm:$0xff]
    %v294 = vld [vmem:[#allocation5 + $0x680] sm:$0xff]
    %v295 = vld [vmem:[#allocation5 + $0x688] sm:$0xff]
    %v296 = vld [vmem:[#allocation5 + $0x690] sm:$0xff]
    %v297 = vld [vmem:[#allocation5 + $0x698] sm:$0xff]
    %v298 = vld [vmem:[#allocation5 + $0x6a0] sm:$0xff]
    %v299 = vld [vmem:[#allocation5 + $0x6a8] sm:$0xff]
    %v300 = vld [vmem:[#allocation5 + $0x6b0] sm:$0xff]
    %v301 = vld [vmem:[#allocation5 + $0x6b8] sm:$0xff]
    %v302 = vld [vmem:[#allocation5 + $0x6c0] sm:$0xff]
    %v303 = vld [vmem:[#allocation5 + $0x6c8] sm:$0xff]
    %v304 = vld [vmem:[#allocation5 + $0x6d0] sm:$0xff]
    %v305 = vld [vmem:[#allocation5 + $0x6d8] sm:$0xff]
    %v306 = vld [vmem:[#allocation5 + $0x6e0] sm:$0xff]
    %v307 = vld [vmem:[#allocation5 + $0x6e8] sm:$0xff]
    %v308 = vld [vmem:[#allocation5 + $0x6f0] sm:$0xff]
    %v309 = vld [vmem:[#allocation5 + $0x6f8] sm:$0xff]
    %v310 = vld [vmem:[#allocation5 + $0x700] sm:$0xff]
    %v311 = vld [vmem:[#allocation5 + $0x708] sm:$0xff]
    %v312 = vld [vmem:[#allocation5 + $0x710] sm:$0xff]
    %v313 = vld [vmem:[#allocation5 + $0x718] sm:$0xff]
    %v314 = vld [vmem:[#allocation5 + $0x720] sm:$0xff]
    %v315 = vld [vmem:[#allocation5 + $0x728] sm:$0xff]
    %v316 = vld [vmem:[#allocation5 + $0x730] sm:$0xff]
    %v317 = vld [vmem:[#allocation5 + $0x738] sm:$0xff]
    %v318 = vld [vmem:[#allocation5 + $0x740] sm:$0xff]
    %v319 = vld [vmem:[#allocation5 + $0x748] sm:$0xff]
    %v320 = vld [vmem:[#allocation5 + $0x750] sm:$0xff]
    %v321 = vld [vmem:[#allocation5 + $0x758] sm:$0xff]
    %v322 = vld [vmem:[#allocation5 + $0x760] sm:$0xff]
    %v323 = vld [vmem:[#allocation5 + $0x768] sm:$0xff]
    %v324 = vld [vmem:[#allocation5 + $0x770] sm:$0xff]
    %v325 = vld [vmem:[#allocation5 + $0x778] sm:$0xff]
    %v326 = vld [vmem:[#allocation5 + $0x780] sm:$0xff]
    %v327 = vld [vmem:[#allocation5 + $0x788] sm:$0xff]
    %v328 = vld [vmem:[#allocation5 + $0x790] sm:$0xff]
    %v329 = vld [vmem:[#allocation5 + $0x798] sm:$0xff]
    %v330 = vld [vmem:[#allocation5 + $0x7a0] sm:$0xff]
    %v331 = vld [vmem:[#allocation5 + $0x7a8] sm:$0xff]
    %v332 = vld [vmem:[#allocation5 + $0x7b0] sm:$0xff]
    %v333 = vld [vmem:[#allocation5 + $0x7b8] sm:$0xff]
    %v334 = vld [vmem:[#allocation5 + $0x7c0] sm:$0xff]
    %v335 = vld [vmem:[#allocation5 + $0x7c8] sm:$0xff]
    %v336 = vld [vmem:[#allocation5 + $0x7d0] sm:$0xff]
    %v337 = vld [vmem:[#allocation5 + $0x7d8] sm:$0xff]
    %v338 = vld [vmem:[#allocation5 + $0x7e0] sm:$0xff]
    %v339 = vld [vmem:[#allocation5 + $0x7e8] sm:$0xff]
    %v340 = vld [vmem:[#allocation5 + $0x7f0] sm:$0xff]
    %v341 = vld [vmem:[#allocation5 + $0x7f8] sm:$0xff]
    %v342 = vld [vmem:[#allocation5 + $0x800] sm:$0xff]
    %v343 = vld [vmem:[#allocation5 + $0x808] sm:$0xff]
    %v344 = vld [vmem:[#allocation5 + $0x810] sm:$0xff]
    %v345 = vld [vmem:[#allocation5 + $0x818] sm:$0xff]
    %v346 = vld [vmem:[#allocation5 + $0x820] sm:$0xff]
    %v347 = vld [vmem:[#allocation5 + $0x828] sm:$0xff]
    %v348 = vld [vmem:[#allocation5 + $0x830] sm:$0xff]
    %v349 = vld [vmem:[#allocation5 + $0x838] sm:$0xff]
    %v350 = vld [vmem:[#allocation5 + $0x840] sm:$0xff]
    %v351 = vld [vmem:[#allocation5 + $0x848] sm:$0xff]
    %v352 = vld [vmem:[#allocation5 + $0x850] sm:$0xff]
    %v353 = vld [vmem:[#allocation5 + $0x858] sm:$0xff]
    %v354 = vld [vmem:[#allocation5 + $0x860] sm:$0xff]
    %v355 = vld [vmem:[#allocation5 + $0x868] sm:$0xff]
    %v356 = vld [vmem:[#allocation5 + $0x870] sm:$0xff]
    %v357 = vld [vmem:[#allocation5 + $0x878] sm:$0xff]
    %v358 = vld [vmem:[#allocation5 + $0x880] sm:$0xff]
    %v359 = vld [vmem:[#allocation5 + $0x888] sm:$0xff]
    %v360 = vld [vmem:[#allocation5 + $0x890] sm:$0xff]
    %v361 = vld [vmem:[#allocation5 + $0x898] sm:$0xff]
    %v362 = vld [vmem:[#allocation5 + $0x8a0] sm:$0xff]
    %v363 = vld [vmem:[#allocation5 + $0x8a8] sm:$0xff]
    %v364 = vld [vmem:[#allocation5 + $0x8b0] sm:$0xff]
    %v365 = vld [vmem:[#allocation5 + $0x8b8] sm:$0xff]
    %v366 = vld [vmem:[#allocation5 + $0x8c0] sm:$0xff]
    %v367 = vld [vmem:[#allocation5 + $0x8c8] sm:$0xff]
    %v368 = vld [vmem:[#allocation5 + $0x8d0] sm:$0xff]
    %v369 = vld [vmem:[#allocation5 + $0x8d8] sm:$0xff]
    %v370 = vld [vmem:[#allocation5 + $0x8e0] sm:$0xff]
    %v371 = vld [vmem:[#allocation5 + $0x8e8] sm:$0xff]
    %v372 = vld [vmem:[#allocation5 + $0x8f0] sm:$0xff]
    %v373 = vld [vmem:[#allocation5 + $0x8f8] sm:$0xff]
    %v374 = vld [vmem:[#allocation5 + $0x900] sm:$0xff]
    %v375 = vld [vmem:[#allocation5 + $0x908] sm:$0xff]
    %v376 = vld [vmem:[#allocation5 + $0x910] sm:$0xff]
    %v377 = vld [vmem:[#allocation5 + $0x918] sm:$0xff]
    %v378 = vld [vmem:[#allocation5 + $0x920] sm:$0xff]
    %v379 = vld [vmem:[#allocation5 + $0x928] sm:$0xff]
    %v380 = vld [vmem:[#allocation5 + $0x930] sm:$0xff]
    %v381 = vld [vmem:[#allocation5 + $0x938] sm:$0xff]
    %v382 = vld [vmem:[#allocation5 + $0x940] sm:$0xff]
    %v383 = vld [vmem:[#allocation5 + $0x948] sm:$0xff]
    %v384 = vld [vmem:[#allocation5 + $0x950] sm:$0xff]
    %v385 = vld [vmem:[#allocation5 + $0x958] sm:$0xff]
    %v386 = vld [vmem:[#allocation5 + $0x960] sm:$0xff]
    %v387 = vld [vmem:[#allocation5 + $0x968] sm:$0xff]
    %v388 = vld [vmem:[#allocation5 + $0x970] sm:$0xff]
    %v389 = vld [vmem:[#allocation5 + $0x978] sm:$0xff]
    %v390 = vld [vmem:[#allocation5 + $0x980] sm:$0xff]
    %v391 = vld [vmem:[#allocation5 + $0x988] sm:$0xff]
    %v392 = vld [vmem:[#allocation5 + $0x990] sm:$0xff]
    %v393 = vld [vmem:[#allocation5 + $0x998] sm:$0xff]
    %v394 = vld [vmem:[#allocation5 + $0x9a0] sm:$0xff]
    %v395 = vld [vmem:[#allocation5 + $0x9a8] sm:$0xff]
    %v396 = vld [vmem:[#allocation5 + $0x9b0] sm:$0xff]
    %v397 = vld [vmem:[#allocation5 + $0x9b8] sm:$0xff]
    %v398 = vld [vmem:[#allocation5 + $0x9c0] sm:$0xff]
    %v399 = vld [vmem:[#allocation5 + $0x9c8] sm:$0xff]
    %v400 = vld [vmem:[#allocation5 + $0x9d0] sm:$0xff]
    %v401 = vld [vmem:[#allocation5 + $0x9d8] sm:$0xff]
    %v402 = vld [vmem:[#allocation5 + $0x9e0] sm:$0xff]
    %v403 = vld [vmem:[#allocation5 + $0x9e8] sm:$0xff]
    %v404 = vld [vmem:[#allocation5 + $0x9f0] sm:$0xff]
    %v405 = vld [vmem:[#allocation5 + $0x9f8] sm:$0xff]
    %v406 = vld [vmem:[#allocation5 + $0xa00] sm:$0xff]
    %v407 = vld [vmem:[#allocation5 + $0xa08] sm:$0xff]
    %v408 = vld [vmem:[#allocation5 + $0xa10] sm:$0xff]
    %v409 = vld [vmem:[#allocation5 + $0xa18] sm:$0xff]
    %v410 = vld [vmem:[#allocation5 + $0xa20] sm:$0xff]
    %v411 = vld [vmem:[#allocation5 + $0xa28] sm:$0xff]
    %v412 = vld [vmem:[#allocation5 + $0xa30] sm:$0xff]
    %v413 = vld [vmem:[#allocation5 + $0xa38] sm:$0xff]
    %v414 = vld [vmem:[#allocation5 + $0xa40] sm:$0xff]
    %v415 = vld [vmem:[#allocation5 + $0xa48] sm:$0xff]
    %v416 = vld [vmem:[#allocation5 + $0xa50] sm:$0xff]
    %v417 = vld [vmem:[#allocation5 + $0xa58] sm:$0xff]
    %v418 = vld [vmem:[#allocation5 + $0xa60] sm:$0xff]
    %v419 = vld [vmem:[#allocation5 + $0xa68] sm:$0xff]
    %v420 = vld [vmem:[#allocation5 + $0xa70] sm:$0xff]
    %v421 = vld [vmem:[#allocation5 + $0xa78] sm:$0xff]
    %v422 = vld [vmem:[#allocation5 + $0xa80] sm:$0xff]
    %v423 = vld [vmem:[#allocation5 + $0xa88] sm:$0xff]
    %v424 = vld [vmem:[#allocation5 + $0xa90] sm:$0xff]
    %v425 = vld [vmem:[#allocation5 + $0xa98] sm:$0xff]
    %v426 = vld [vmem:[#allocation5 + $0xaa0] sm:$0xff]
    %v427 = vld [vmem:[#allocation5 + $0xaa8] sm:$0xff]
    %v428 = vld [vmem:[#allocation5 + $0xab0] sm:$0xff]
    %v429 = vld [vmem:[#allocation5 + $0xab8] sm:$0xff]
    %v430 = vld [vmem:[#allocation5 + $0xac0] sm:$0xff]
    %v431 = vld [vmem:[#allocation5 + $0xac8] sm:$0xff]
    %v432 = vld [vmem:[#allocation5 + $0xad0] sm:$0xff]
    %v433 = vld [vmem:[#allocation5 + $0xad8] sm:$0xff]
    %v434 = vld [vmem:[#allocation5 + $0xae0] sm:$0xff]
    %v435 = vld [vmem:[#allocation5 + $0xae8] sm:$0xff]
    %v436 = vld [vmem:[#allocation5 + $0xaf0] sm:$0xff]
    %v437 = vld [vmem:[#allocation5 + $0xaf8] sm:$0xff]
    %v438 = vld [vmem:[#allocation5 + $0xb00] sm:$0xff]
    %v439 = vld [vmem:[#allocation5 + $0xb08] sm:$0xff]
    %v440 = vld [vmem:[#allocation5 + $0xb10] sm:$0xff]
    %v441 = vld [vmem:[#allocation5 + $0xb18] sm:$0xff]
    %v442 = vld [vmem:[#allocation5 + $0xb20] sm:$0xff]
    %v443 = vld [vmem:[#allocation5 + $0xb28] sm:$0xff]
    %v444 = vld [vmem:[#allocation5 + $0xb30] sm:$0xff]
    %v445 = vld [vmem:[#allocation5 + $0xb38] sm:$0xff]
    %v446 = vld [vmem:[#allocation5 + $0xb40] sm:$0xff]
    %v447 = vld [vmem:[#allocation5 + $0xb48] sm:$0xff]
    %v448 = vld [vmem:[#allocation5 + $0xb50] sm:$0xff]
    %v449 = vld [vmem:[#allocation5 + $0xb58] sm:$0xff]
    %v450 = vld [vmem:[#allocation5 + $0xb60] sm:$0xff]
    %v451 = vld [vmem:[#allocation5 + $0xb68] sm:$0xff]
    %v452 = vld [vmem:[#allocation5 + $0xb70] sm:$0xff]
    %v453 = vld [vmem:[#allocation5 + $0xb78] sm:$0xff]
    %v454 = vld [vmem:[#allocation5 + $0xb80] sm:$0xff]
    %v455 = vld [vmem:[#allocation5 + $0xb88] sm:$0xff]
    %v456 = vld [vmem:[#allocation5 + $0xb90] sm:$0xff]
    %v457 = vld [vmem:[#allocation5 + $0xb98] sm:$0xff]
    %v458 = vld [vmem:[#allocation5 + $0xba0] sm:$0xff]
    %v459 = vld [vmem:[#allocation5 + $0xba8] sm:$0xff]
    %v460 = vld [vmem:[#allocation5 + $0xbb0] sm:$0xff]
    %v461 = vld [vmem:[#allocation5 + $0xbb8] sm:$0xff]
    %v462 = vld [vmem:[#allocation5 + $0xbc0] sm:$0xff]
    %v463 = vld [vmem:[#allocation5 + $0xbc8] sm:$0xff]
    %v464 = vld [vmem:[#allocation5 + $0xbd0] sm:$0xff]
    %v465 = vld [vmem:[#allocation5 + $0xbd8] sm:$0xff]
    %v466 = vld [vmem:[#allocation5 + $0xbe0] sm:$0xff]
    %v467 = vld [vmem:[#allocation5 + $0xbe8] sm:$0xff]
    %v468 = vld [vmem:[#allocation5 + $0xbf0] sm:$0xff]
    %v469 = vld [vmem:[#allocation5 + $0xbf8] sm:$0xff]
    %v470 = vld [vmem:[#allocation5 + $0xc00] sm:$0xff]
    %v471 = vld [vmem:[#allocation5 + $0xc08] sm:$0xff]
    %v472 = vld [vmem:[#allocation5 + $0xc10] sm:$0xff]
    %v473 = vld [vmem:[#allocation5 + $0xc18] sm:$0xff]
    %v474 = vld [vmem:[#allocation5 + $0xc20] sm:$0xff]
    %v475 = vld [vmem:[#allocation5 + $0xc28] sm:$0xff]
    %v476 = vld [vmem:[#allocation5 + $0xc30] sm:$0xff]
    %v477 = vld [vmem:[#allocation5 + $0xc38] sm:$0xff]
    %v478 = vld [vmem:[#allocation5 + $0xc40] sm:$0xff]
    %v479 = vld [vmem:[#allocation5 + $0xc48] sm:$0xff]
    %v480 = vld [vmem:[#allocation5 + $0xc50] sm:$0xff]
    %v481 = vld [vmem:[#allocation5 + $0xc58] sm:$0xff]
    %v482 = vld [vmem:[#allocation5 + $0xc60] sm:$0xff]
    %v483 = vld [vmem:[#allocation5 + $0xc68] sm:$0xff]
    %v484 = vld [vmem:[#allocation5 + $0xc70] sm:$0xff]
    %v485 = vld [vmem:[#allocation5 + $0xc78] sm:$0xff]
    %v486 = vld [vmem:[#allocation5 + $0xc80] sm:$0xff]
    %v487 = vld [vmem:[#allocation5 + $0xc88] sm:$0xff]
    %v488 = vld [vmem:[#allocation5 + $0xc90] sm:$0xff]
    %v489 = vld [vmem:[#allocation5 + $0xc98] sm:$0xff]
    %v490 = vld [vmem:[#allocation5 + $0xca0] sm:$0xff]
    %v491 = vld [vmem:[#allocation5 + $0xca8] sm:$0xff]
    %v492 = vld [vmem:[#allocation5 + $0xcb0] sm:$0xff]
    %v493 = vld [vmem:[#allocation5 + $0xcb8] sm:$0xff]
    %v494 = vld [vmem:[#allocation5 + $0xcc0] sm:$0xff]
    %v495 = vld [vmem:[#allocation5 + $0xcc8] sm:$0xff]
    %v496 = vld [vmem:[#allocation5 + $0xcd0] sm:$0xff]
    %v497 = vld [vmem:[#allocation5 + $0xcd8] sm:$0xff]
    %v498 = vld [vmem:[#allocation5 + $0xce0] sm:$0xff]
    %v499 = vld [vmem:[#allocation5 + $0xce8] sm:$0xff]
    %v500 = vld [vmem:[#allocation5 + $0xcf0] sm:$0xff]
    %v501 = vld [vmem:[#allocation5 + $0xcf8] sm:$0xff]
    %v502 = vld [vmem:[#allocation5 + $0xd00] sm:$0xff]
    %v503 = vld [vmem:[#allocation5 + $0xd08] sm:$0xff]
    %v504 = vld [vmem:[#allocation5 + $0xd10] sm:$0xff]
    %v505 = vld [vmem:[#allocation5 + $0xd18] sm:$0xff]
    %v506 = vld [vmem:[#allocation5 + $0xd20] sm:$0xff]
    %v507 = vld [vmem:[#allocation5 + $0xd28] sm:$0xff]
    %v508 = vld [vmem:[#allocation5 + $0xd30] sm:$0xff]
    %v509 = vld [vmem:[#allocation5 + $0xd38] sm:$0xff]
    %v510 = vld [vmem:[#allocation5 + $0xd40] sm:$0xff]
    %v511 = vld [vmem:[#allocation5 + $0xd48] sm:$0xff]
    %v512 = vld [vmem:[#allocation5 + $0xd50] sm:$0xff]
    %v513 = vld [vmem:[#allocation5 + $0xd58] sm:$0xff]
    %v514 = vld [vmem:[#allocation5 + $0xd60] sm:$0xff]
    %v515 = vld [vmem:[#allocation5 + $0xd68] sm:$0xff]
    %v516 = vld [vmem:[#allocation5 + $0xd70] sm:$0xff]
    %v517 = vld [vmem:[#allocation5 + $0xd78] sm:$0xff]
    %v518 = vld [vmem:[#allocation5 + $0xd80] sm:$0xff]
    %v519 = vld [vmem:[#allocation5 + $0xd88] sm:$0xff]
    %v520 = vld [vmem:[#allocation5 + $0xd90] sm:$0xff]
    %v521 = vld [vmem:[#allocation5 + $0xd98] sm:$0xff]
    %v522 = vld [vmem:[#allocation5 + $0xda0] sm:$0xff]
    %v523 = vld [vmem:[#allocation5 + $0xda8] sm:$0xff]
    %v524 = vld [vmem:[#allocation5 + $0xdb0] sm:$0xff]
    %v525 = vld [vmem:[#allocation5 + $0xdb8] sm:$0xff]
    %v526 = vld [vmem:[#allocation5 + $0xdc0] sm:$0xff]
    %v527 = vld [vmem:[#allocation5 + $0xdc8] sm:$0xff]
    %v528 = vld [vmem:[#allocation5 + $0xdd0] sm:$0xff]
    %v529 = vld [vmem:[#allocation5 + $0xdd8] sm:$0xff]
    %v530 = vld [vmem:[#allocation5 + $0xde0] sm:$0xff]
    %v531 = vld [vmem:[#allocation5 + $0xde8] sm:$0xff]
    %v532 = vld [vmem:[#allocation5 + $0xdf0] sm:$0xff]
    %v533 = vld [vmem:[#allocation5 + $0xdf8] sm:$0xff]
    %v534 = vld [vmem:[#allocation5 + $0xe00] sm:$0xff]
    %v535 = vld [vmem:[#allocation5 + $0xe08] sm:$0xff]
    %v536 = vld [vmem:[#allocation5 + $0xe10] sm:$0xff]
    %v537 = vld [vmem:[#allocation5 + $0xe18] sm:$0xff]
    %v538 = vld [vmem:[#allocation5 + $0xe20] sm:$0xff]
    %v539 = vld [vmem:[#allocation5 + $0xe28] sm:$0xff]
    %v540 = vld [vmem:[#allocation5 + $0xe30] sm:$0xff]
    %v541 = vld [vmem:[#allocation5 + $0xe38] sm:$0xff]
    %v542 = vld [vmem:[#allocation5 + $0xe40] sm:$0xff]
    %v543 = vld [vmem:[#allocation5 + $0xe48] sm:$0xff]
    %v544 = vld [vmem:[#allocation5 + $0xe50] sm:$0xff]
    %v545 = vld [vmem:[#allocation5 + $0xe58] sm:$0xff]
    %v546 = vld [vmem:[#allocation5 + $0xe60] sm:$0xff]
    %v547 = vld [vmem:[#allocation5 + $0xe68] sm:$0xff]
    %v548 = vld [vmem:[#allocation5 + $0xe70] sm:$0xff]
    %v549 = vld [vmem:[#allocation5 + $0xe78] sm:$0xff]
    %v550 = vld [vmem:[#allocation5 + $0xe80] sm:$0xff]
    %v551 = vld [vmem:[#allocation5 + $0xe88] sm:$0xff]
    %v552 = vld [vmem:[#allocation5 + $0xe90] sm:$0xff]
    %v553 = vld [vmem:[#allocation5 + $0xe98] sm:$0xff]
    %v554 = vld [vmem:[#allocation5 + $0xea0] sm:$0xff]
    %v555 = vld [vmem:[#allocation5 + $0xea8] sm:$0xff]
    %v556 = vld [vmem:[#allocation5 + $0xeb0] sm:$0xff]
    %v557 = vld [vmem:[#allocation5 + $0xeb8] sm:$0xff]
    %v558 = vld [vmem:[#allocation5 + $0xec0] sm:$0xff]
    %v559 = vld [vmem:[#allocation5 + $0xec8] sm:$0xff]
    %v560 = vld [vmem:[#allocation5 + $0xed0] sm:$0xff]
    %v561 = vld [vmem:[#allocation5 + $0xed8] sm:$0xff]
    %v562 = vld [vmem:[#allocation5 + $0xee0] sm:$0xff]
    %v563 = vld [vmem:[#allocation5 + $0xee8] sm:$0xff]
    %v564 = vld [vmem:[#allocation5 + $0xef0] sm:$0xff]
    %v565 = vld [vmem:[#allocation5 + $0xef8] sm:$0xff]
    %v566 = vld [vmem:[#allocation5 + $0xf00] sm:$0xff]
    %v567 = vld [vmem:[#allocation5 + $0xf08] sm:$0xff]
    %v568 = vld [vmem:[#allocation5 + $0xf10] sm:$0xff]
    %v569 = vld [vmem:[#allocation5 + $0xf18] sm:$0xff]
    %v570 = vld [vmem:[#allocation5 + $0xf20] sm:$0xff]
    %v571 = vld [vmem:[#allocation5 + $0xf28] sm:$0xff]
    %v572 = vld [vmem:[#allocation5 + $0xf30] sm:$0xff]
    %v573 = vld [vmem:[#allocation5 + $0xf38] sm:$0xff]
    %v574 = vld [vmem:[#allocation5 + $0xf40] sm:$0xff]
    %v575 = vld [vmem:[#allocation5 + $0xf48] sm:$0xff]
    %v576 = vld [vmem:[#allocation5 + $0xf50] sm:$0xff]
    %v577 = vld [vmem:[#allocation5 + $0xf58] sm:$0xff]
    %v578 = vld [vmem:[#allocation5 + $0xf60] sm:$0xff]
    %v579 = vld [vmem:[#allocation5 + $0xf68] sm:$0xff]
    %v580 = vld [vmem:[#allocation5 + $0xf70] sm:$0xff]
    %v581 = vld [vmem:[#allocation5 + $0xf78] sm:$0xff]
    %v582 = vld [vmem:[#allocation5 + $0xf80] sm:$0xff]
    %v583 = vld [vmem:[#allocation5 + $0xf88] sm:$0xff]
    %v584 = vld [vmem:[#allocation5 + $0xf90] sm:$0xff]
    %v585 = vld [vmem:[#allocation5 + $0xf98] sm:$0xff]
    %v586 = vld [vmem:[#allocation5 + $0xfa0] sm:$0xff]
    %v587 = vld [vmem:[#allocation5 + $0xfa8] sm:$0xff]
    %v588 = vld [vmem:[#allocation5 + $0xfb0] sm:$0xff]
    %v589 = vld [vmem:[#allocation5 + $0xfb8] sm:$0xff]
    %v590 = vld [vmem:[#allocation5 + $0xfc0] sm:$0xff]
    %v591 = vld [vmem:[#allocation5 + $0xfc8] sm:$0xff]
    %v592 = vld [vmem:[#allocation5 + $0xfd0] sm:$0xff]
    %v593 = vld [vmem:[#allocation5 + $0xfd8] sm:$0xff]
    %v594 = vld [vmem:[#allocation5 + $0xfe0] sm:$0xff]
    %v595 = vld [vmem:[#allocation5 + $0xfe8] sm:$0xff]
    %v596 = vld [vmem:[#allocation5 + $0xff0] sm:$0xff]
    %v597 = vld [vmem:[#allocation5 + $0xff8] sm:$0xff]
    %v598 = vld [vmem:[#allocation5 + $0x1000] sm:$0xff]
    %v599 = vld [vmem:[#allocation5 + $0x1008] sm:$0xff]
    %v600 = vld [vmem:[#allocation5 + $0x1010] sm:$0xff]
    %v601 = vld [vmem:[#allocation5 + $0x1018] sm:$0xff]
    %v602 = vld [vmem:[#allocation5 + $0x1020] sm:$0xff]
    %v603 = vld [vmem:[#allocation5 + $0x1028] sm:$0xff]
    %v604 = vld [vmem:[#allocation5 + $0x1030] sm:$0xff]
    %v605 = vld [vmem:[#allocation5 + $0x1038] sm:$0xff]
    %v606 = vld [vmem:[#allocation5 + $0x1040] sm:$0xff]
    %v607 = vld [vmem:[#allocation5 + $0x1048] sm:$0xff]
    %v608 = vld [vmem:[#allocation5 + $0x1050] sm:$0xff]
    %v609 = vld [vmem:[#allocation5 + $0x1058] sm:$0xff]
    %v610 = vld [vmem:[#allocation5 + $0x1060] sm:$0xff]
    %v611 = vld [vmem:[#allocation5 + $0x1068] sm:$0xff]
    %v612 = vld [vmem:[#allocation5 + $0x1070] sm:$0xff]
    %v613 = vld [vmem:[#allocation5 + $0x1078] sm:$0xff]
    %v614 = vld [vmem:[#allocation5 + $0x1080] sm:$0xff]
    %v615 = vld [vmem:[#allocation5 + $0x1088] sm:$0xff]
    %v616 = vld [vmem:[#allocation5 + $0x1090] sm:$0xff]
    %v617 = vld [vmem:[#allocation5 + $0x1098] sm:$0xff]
    %v618 = vld [vmem:[#allocation5 + $0x10a0] sm:$0xff]
    %v619 = vld [vmem:[#allocation5 + $0x10a8] sm:$0xff]
    %v620 = vld [vmem:[#allocation5 + $0x10b0] sm:$0xff]
    %v621 = vld [vmem:[#allocation5 + $0x10b8] sm:$0xff]
    %v622 = vld [vmem:[#allocation5 + $0x10c0] sm:$0xff]
    %v623 = vld [vmem:[#allocation5 + $0x10c8] sm:$0xff]
    %v624 = vld [vmem:[#allocation5 + $0x10d0] sm:$0xff]
    %v625 = vld [vmem:[#allocation5 + $0x10d8] sm:$0xff]
    %v626 = vld [vmem:[#allocation5 + $0x10e0] sm:$0xff]
    %v627 = vld [vmem:[#allocation5 + $0x10e8] sm:$0xff]
    %v628 = vld [vmem:[#allocation5 + $0x10f0] sm:$0xff]
    %v629 = vld [vmem:[#allocation5 + $0x10f8] sm:$0xff]
    %v630 = vld [vmem:[#allocation5 + $0x1100] sm:$0xff]
    %v631 = vld [vmem:[#allocation5 + $0x1108] sm:$0xff]
    %v632 = vld [vmem:[#allocation5 + $0x1110] sm:$0xff]
    %v633 = vld [vmem:[#allocation5 + $0x1118] sm:$0xff]
    %v634 = vld [vmem:[#allocation5 + $0x1120] sm:$0xff]
    %v635 = vld [vmem:[#allocation5 + $0x1128] sm:$0xff]
    %v636 = vld [vmem:[#allocation5 + $0x1130] sm:$0xff]
    %v637 = vld [vmem:[#allocation5 + $0x1138] sm:$0xff]
    %v638 = vld [vmem:[#allocation5 + $0x1140] sm:$0xff]
    %v639 = vld [vmem:[#allocation5 + $0x1148] sm:$0xff]
    %v640 = vld [vmem:[#allocation5 + $0x1150] sm:$0xff]
    %v641 = vld [vmem:[#allocation5 + $0x1158] sm:$0xff]
    %v642 = vld [vmem:[#allocation5 + $0x1160] sm:$0xff]
    %v643 = vld [vmem:[#allocation5 + $0x1168] sm:$0xff]
    %v644 = vld [vmem:[#allocation5 + $0x1170] sm:$0xff]
    %v645 = vld [vmem:[#allocation5 + $0x1178] sm:$0xff]
    %v646 = vld [vmem:[#allocation5 + $0x1180] sm:$0xff]
    %v647 = vld [vmem:[#allocation5 + $0x1188] sm:$0xff]
    %v648 = vld [vmem:[#allocation5 + $0x1190] sm:$0xff]
    %v649 = vld [vmem:[#allocation5 + $0x1198] sm:$0xff]
    %v650 = vld [vmem:[#allocation5 + $0x11a0] sm:$0xff]
    %v651 = vld [vmem:[#allocation5 + $0x11a8] sm:$0xff]
    %v652 = vld [vmem:[#allocation5 + $0x11b0] sm:$0xff]
    %v653 = vld [vmem:[#allocation5 + $0x11b8] sm:$0xff]
    %v654 = vld [vmem:[#allocation5 + $0x11c0] sm:$0xff]
    %v655 = vld [vmem:[#allocation5 + $0x11c8] sm:$0xff]
    %v656 = vld [vmem:[#allocation5 + $0x11d0] sm:$0xff]
    %v657 = vld [vmem:[#allocation5 + $0x11d8] sm:$0xff]
    %v658 = vld [vmem:[#allocation5 + $0x11e0] sm:$0xff]
    %v659 = vld [vmem:[#allocation5 + $0x11e8] sm:$0xff]
    %v660 = vld [vmem:[#allocation5 + $0x11f0] sm:$0xff]
    %v661 = vld [vmem:[#allocation5 + $0x11f8] sm:$0xff]
    %v662 = vld [vmem:[#allocation5 + $0x1200] sm:$0xff]
    %v663 = vld [vmem:[#allocation5 + $0x1208] sm:$0xff]
    %v664 = vld [vmem:[#allocation5 + $0x1210] sm:$0xff]
    %v665 = vld [vmem:[#allocation5 + $0x1218] sm:$0xff]
    %v666 = vld [vmem:[#allocation5 + $0x1220] sm:$0xff]
    %v667 = vld [vmem:[#allocation5 + $0x1228] sm:$0xff]
    %v668 = vld [vmem:[#allocation5 + $0x1230] sm:$0xff]
    %v669 = vld [vmem:[#allocation5 + $0x1238] sm:$0xff]
    %v670 = vld [vmem:[#allocation5 + $0x1240] sm:$0xff]
    %v671 = vld [vmem:[#allocation5 + $0x1248] sm:$0xff]
    %v672 = vld [vmem:[#allocation5 + $0x1250] sm:$0xff]
    %v673 = vld [vmem:[#allocation5 + $0x1258] sm:$0xff]
    %v674 = vld [vmem:[#allocation5 + $0x1260] sm:$0xff]
    %v675 = vld [vmem:[#allocation5 + $0x1268] sm:$0xff]
    %v676 = vld [vmem:[#allocation5 + $0x1270] sm:$0xff]
    %v677 = vld [vmem:[#allocation5 + $0x1278] sm:$0xff]
    %v678 = vld [vmem:[#allocation5 + $0x1280] sm:$0xff]
    %v679 = vld [vmem:[#allocation5 + $0x1288] sm:$0xff]
    %v680 = vld [vmem:[#allocation5 + $0x1290] sm:$0xff]
    %v681 = vld [vmem:[#allocation5 + $0x1298] sm:$0xff]
    %v682 = vld [vmem:[#allocation5 + $0x12a0] sm:$0xff]
    %v683 = vld [vmem:[#allocation5 + $0x12a8] sm:$0xff]
    %v684 = vld [vmem:[#allocation5 + $0x12b0] sm:$0xff]
    %v685 = vld [vmem:[#allocation5 + $0x12b8] sm:$0xff]
    %v686 = vld [vmem:[#allocation5 + $0x12c0] sm:$0xff]
    %v687 = vld [vmem:[#allocation5 + $0x12c8] sm:$0xff]
    %v688 = vld [vmem:[#allocation5 + $0x12d0] sm:$0xff]
    %v689 = vld [vmem:[#allocation5 + $0x12d8] sm:$0xff]
    %v690 = vld [vmem:[#allocation5 + $0x12e0] sm:$0xff]
    %v691 = vld [vmem:[#allocation5 + $0x12e8] sm:$0xff]
    %v692 = vld [vmem:[#allocation5 + $0x12f0] sm:$0xff]
    %v693 = vld [vmem:[#allocation5 + $0x12f8] sm:$0xff]
    %v694 = vld [vmem:[#allocation5 + $0x1300] sm:$0xff]
    %v695 = vld [vmem:[#allocation5 + $0x1308] sm:$0xff]
    %v696 = vld [vmem:[#allocation5 + $0x1310] sm:$0xff]
    %v697 = vld [vmem:[#allocation5 + $0x1318] sm:$0xff]
    %v698 = vld [vmem:[#allocation5 + $0x1320] sm:$0xff]
    %v699 = vld [vmem:[#allocation5 + $0x1328] sm:$0xff]
    %v700 = vld [vmem:[#allocation5 + $0x1330] sm:$0xff]
    %v701 = vld [vmem:[#allocation5 + $0x1338] sm:$0xff]
    %v702 = vld [vmem:[#allocation5 + $0x1340] sm:$0xff]
    %v703 = vld [vmem:[#allocation5 + $0x1348] sm:$0xff]
    %v704 = vld [vmem:[#allocation5 + $0x1350] sm:$0xff]
    %v705 = vld [vmem:[#allocation5 + $0x1358] sm:$0xff]
    %v706 = vld [vmem:[#allocation5 + $0x1360] sm:$0xff]
    %v707 = vld [vmem:[#allocation5 + $0x1368] sm:$0xff]
    %v708 = vld [vmem:[#allocation5 + $0x1370] sm:$0xff]
    %v709 = vld [vmem:[#allocation5 + $0x1378] sm:$0xff]
    %v710 = vld [vmem:[#allocation5 + $0x1380] sm:$0xff]
    %v711 = vld [vmem:[#allocation5 + $0x1388] sm:$0xff]
    %v712 = vld [vmem:[#allocation5 + $0x1390] sm:$0xff]
    %v713 = vld [vmem:[#allocation5 + $0x1398] sm:$0xff]
    %v714 = vld [vmem:[#allocation5 + $0x13a0] sm:$0xff]
    %v715 = vld [vmem:[#allocation5 + $0x13a8] sm:$0xff]
    %v716 = vld [vmem:[#allocation5 + $0x13b0] sm:$0xff]
    %v717 = vld [vmem:[#allocation5 + $0x13b8] sm:$0xff]
    %v718 = vld [vmem:[#allocation5 + $0x13c0] sm:$0xff]
    %v719 = vld [vmem:[#allocation5 + $0x13c8] sm:$0xff]
    %v720 = vld [vmem:[#allocation5 + $0x13d0] sm:$0xff]
    %v721 = vld [vmem:[#allocation5 + $0x13d8] sm:$0xff]
    %v722 = vld [vmem:[#allocation5 + $0x13e0] sm:$0xff]
    %v723 = vld [vmem:[#allocation5 + $0x13e8] sm:$0xff]
    %v724 = vld [vmem:[#allocation5 + $0x13f0] sm:$0xff]
    %v725 = vld [vmem:[#allocation5 + $0x13f8] sm:$0xff]
    %v726 = vld [vmem:[#allocation5 + $0x1400] sm:$0xff]
    %v727 = vld [vmem:[#allocation5 + $0x1408] sm:$0xff]
    %v728 = vld [vmem:[#allocation5 + $0x1410] sm:$0xff]
    %v729 = vld [vmem:[#allocation5 + $0x1418] sm:$0xff]
    %v730 = vld [vmem:[#allocation5 + $0x1420] sm:$0xff]
    %v731 = vld [vmem:[#allocation5 + $0x1428] sm:$0xff]
    %v732 = vld [vmem:[#allocation5 + $0x1430] sm:$0xff]
    %v733 = vld [vmem:[#allocation5 + $0x1438] sm:$0xff]
    %v734 = vld [vmem:[#allocation5 + $0x1440] sm:$0xff]
    %v735 = vld [vmem:[#allocation5 + $0x1448] sm:$0xff]
    %v736 = vld [vmem:[#allocation5 + $0x1450] sm:$0xff]
    %v737 = vld [vmem:[#allocation5 + $0x1458] sm:$0xff]
    %v738 = vld [vmem:[#allocation5 + $0x1460] sm:$0xff]
    %v739 = vld [vmem:[#allocation5 + $0x1468] sm:$0xff]
    %v740 = vld [vmem:[#allocation5 + $0x1470] sm:$0xff]
    %v741 = vld [vmem:[#allocation5 + $0x1478] sm:$0xff]
    %v742 = vld [vmem:[#allocation5 + $0x1480] sm:$0xff]
    %v743 = vld [vmem:[#allocation5 + $0x1488] sm:$0xff]
    %v744 = vld [vmem:[#allocation5 + $0x1490] sm:$0xff]
    %v745 = vld [vmem:[#allocation5 + $0x1498] sm:$0xff]
    %v746 = vld [vmem:[#allocation5 + $0x14a0] sm:$0xff]
    %v747 = vld [vmem:[#allocation5 + $0x14a8] sm:$0xff]
    %v748 = vld [vmem:[#allocation5 + $0x14b0] sm:$0xff]
    %v749 = vld [vmem:[#allocation5 + $0x14b8] sm:$0xff]
    %v750 = vld [vmem:[#allocation5 + $0x14c0] sm:$0xff]
    %v751 = vld [vmem:[#allocation5 + $0x14c8] sm:$0xff]
    %v752 = vld [vmem:[#allocation5 + $0x14d0] sm:$0xff]
    %v753 = vld [vmem:[#allocation5 + $0x14d8] sm:$0xff]
    %v754 = vld [vmem:[#allocation5 + $0x14e0] sm:$0xff]
    %v755 = vld [vmem:[#allocation5 + $0x14e8] sm:$0xff]
    %v756 = vld [vmem:[#allocation5 + $0x14f0] sm:$0xff]
    %v757 = vld [vmem:[#allocation5 + $0x14f8] sm:$0xff]
    %v758 = vld [vmem:[#allocation5 + $0x1500] sm:$0xff]
    %v759 = vld [vmem:[#allocation5 + $0x1508] sm:$0xff]
    %v760 = vld [vmem:[#allocation5 + $0x1510] sm:$0xff]
    %v761 = vld [vmem:[#allocation5 + $0x1518] sm:$0xff]
    %v762 = vld [vmem:[#allocation5 + $0x1520] sm:$0xff]
    %v763 = vld [vmem:[#allocation5 + $0x1528] sm:$0xff]
    %v764 = vld [vmem:[#allocation5 + $0x1530] sm:$0xff]
    %v765 = vld [vmem:[#allocation5 + $0x1538] sm:$0xff]
    %v766 = vld [vmem:[#allocation5 + $0x1540] sm:$0xff]
    %v767 = vld [vmem:[#allocation5 + $0x1548] sm:$0xff]
    %v768 = vld [vmem:[#allocation5 + $0x1550] sm:$0xff]
    %v769 = vld [vmem:[#allocation5 + $0x1558] sm:$0xff]
    %v770 = vld [vmem:[#allocation5 + $0x1560] sm:$0xff]
    %v771 = vld [vmem:[#allocation5 + $0x1568] sm:$0xff]
    %v772 = vld [vmem:[#allocation5 + $0x1570] sm:$0xff]
    %v773 = vld [vmem:[#allocation5 + $0x1578] sm:$0xff]
    %v774 = vld [vmem:[#allocation5 + $0x1580] sm:$0xff]
    %v775 = vld [vmem:[#allocation5 + $0x1588] sm:$0xff]
    %v776 = vld [vmem:[#allocation5 + $0x1590] sm:$0xff]
    %v777 = vld [vmem:[#allocation5 + $0x1598] sm:$0xff]
    %v778 = vld [vmem:[#allocation5 + $0x15a0] sm:$0xff]
    %v779 = vld [vmem:[#allocation5 + $0x15a8] sm:$0xff]
    %v780 = vld [vmem:[#allocation5 + $0x15b0] sm:$0xff]
    %v781 = vld [vmem:[#allocation5 + $0x15b8] sm:$0xff]
    %v782 = vld [vmem:[#allocation5 + $0x15c0] sm:$0xff]
    %v783 = vld [vmem:[#allocation5 + $0x15c8] sm:$0xff]
    %v784 = vld [vmem:[#allocation5 + $0x15d0] sm:$0xff]
    %v785 = vld [vmem:[#allocation5 + $0x15d8] sm:$0xff]
    %v786 = vld [vmem:[#allocation5 + $0x15e0] sm:$0xff]
    %v787 = vld [vmem:[#allocation5 + $0x15e8] sm:$0xff]
    %v788 = vld [vmem:[#allocation5 + $0x15f0] sm:$0xff]
    %v789 = vld [vmem:[#allocation5 + $0x15f8] sm:$0xff]
    %v790 = vld [vmem:[#allocation5 + $0x1600] sm:$0xff]
    %v791 = vld [vmem:[#allocation5 + $0x1608] sm:$0xff]
    %v792 = vld [vmem:[#allocation5 + $0x1610] sm:$0xff]
    %v793 = vld [vmem:[#allocation5 + $0x1618] sm:$0xff]
    %v794 = vld [vmem:[#allocation5 + $0x1620] sm:$0xff]
    %v795 = vld [vmem:[#allocation5 + $0x1628] sm:$0xff]
    %v796 = vld [vmem:[#allocation5 + $0x1630] sm:$0xff]
    %v797 = vld [vmem:[#allocation5 + $0x1638] sm:$0xff]
    %v798 = vld [vmem:[#allocation5 + $0x1640] sm:$0xff]
    %v799 = vld [vmem:[#allocation5 + $0x1648] sm:$0xff]
    %v800 = vld [vmem:[#allocation5 + $0x1650] sm:$0xff]
    %v801 = vld [vmem:[#allocation5 + $0x1658] sm:$0xff]
    %v802 = vld [vmem:[#allocation5 + $0x1660] sm:$0xff]
    %v803 = vld [vmem:[#allocation5 + $0x1668] sm:$0xff]
    %v804 = vld [vmem:[#allocation5 + $0x1670] sm:$0xff]
    %v805 = vld [vmem:[#allocation5 + $0x1678] sm:$0xff]
    %v806 = vld [vmem:[#allocation5 + $0x1680] sm:$0xff]
    %v807 = vld [vmem:[#allocation5 + $0x1688] sm:$0xff]
    %v808 = vld [vmem:[#allocation5 + $0x1690] sm:$0xff]
    %v809 = vld [vmem:[#allocation5 + $0x1698] sm:$0xff]
    %v810 = vld [vmem:[#allocation5 + $0x16a0] sm:$0xff]
    %v811 = vld [vmem:[#allocation5 + $0x16a8] sm:$0xff]
    %v812 = vld [vmem:[#allocation5 + $0x16b0] sm:$0xff]
    %v813 = vld [vmem:[#allocation5 + $0x16b8] sm:$0xff]
    %v814 = vld [vmem:[#allocation5 + $0x16c0] sm:$0xff]
    %v815 = vld [vmem:[#allocation5 + $0x16c8] sm:$0xff]
    %v816 = vld [vmem:[#allocation5 + $0x16d0] sm:$0xff]
    %v817 = vld [vmem:[#allocation5 + $0x16d8] sm:$0xff]
    %v818 = vld [vmem:[#allocation5 + $0x16e0] sm:$0xff]
    %v819 = vld [vmem:[#allocation5 + $0x16e8] sm:$0xff]
    %v820 = vld [vmem:[#allocation5 + $0x16f0] sm:$0xff]
    %v821 = vld [vmem:[#allocation5 + $0x16f8] sm:$0xff]
    %v822 = vld [vmem:[#allocation5 + $0x1700] sm:$0xff]
    %v823 = vld [vmem:[#allocation5 + $0x1708] sm:$0xff]
    %v824 = vld [vmem:[#allocation5 + $0x1710] sm:$0xff]
    %v825 = vld [vmem:[#allocation5 + $0x1718] sm:$0xff]
    %v826 = vld [vmem:[#allocation5 + $0x1720] sm:$0xff]
    %v827 = vld [vmem:[#allocation5 + $0x1728] sm:$0xff]
    %v828 = vld [vmem:[#allocation5 + $0x1730] sm:$0xff]
    %v829 = vld [vmem:[#allocation5 + $0x1738] sm:$0xff]
    %v830 = vld [vmem:[#allocation5 + $0x1740] sm:$0xff]
    %v831 = vld [vmem:[#allocation5 + $0x1748] sm:$0xff]
    %v832 = vld [vmem:[#allocation5 + $0x1750] sm:$0xff]
    %v833 = vld [vmem:[#allocation5 + $0x1758] sm:$0xff]
    %v834 = vld [vmem:[#allocation5 + $0x1760] sm:$0xff]
    %v835 = vld [vmem:[#allocation5 + $0x1768] sm:$0xff]
    %v836 = vld [vmem:[#allocation5 + $0x1770] sm:$0xff]
    %v837 = vld [vmem:[#allocation5 + $0x1778] sm:$0xff]
    %v838 = vld [vmem:[#allocation5 + $0x1780] sm:$0xff]
    %v839 = vld [vmem:[#allocation5 + $0x1788] sm:$0xff]
    %v840 = vld [vmem:[#allocation5 + $0x1790] sm:$0xff]
    %v841 = vld [vmem:[#allocation5 + $0x1798] sm:$0xff]
    %v842 = vld [vmem:[#allocation5 + $0x17a0] sm:$0xff]
    %v843 = vld [vmem:[#allocation5 + $0x17a8] sm:$0xff]
    %v844 = vld [vmem:[#allocation5 + $0x17b0] sm:$0xff]
    %v845 = vld [vmem:[#allocation5 + $0x17b8] sm:$0xff]
    %v846 = vld [vmem:[#allocation5 + $0x17c0] sm:$0xff]
    %v847 = vld [vmem:[#allocation5 + $0x17c8] sm:$0xff]
    %v848 = vld [vmem:[#allocation5 + $0x17d0] sm:$0xff]
    %v849 = vld [vmem:[#allocation5 + $0x17d8] sm:$0xff]
    %v850 = vld [vmem:[#allocation5 + $0x17e0] sm:$0xff]
    %v851 = vld [vmem:[#allocation5 + $0x17e8] sm:$0xff]
    %v852 = vld [vmem:[#allocation5 + $0x17f0] sm:$0xff]
    %v853 = vld [vmem:[#allocation5 + $0x17f8] sm:$0xff]
    %v854 = vld [vmem:[#allocation5 + $0x1800] sm:$0xff]
    %v855 = vld [vmem:[#allocation5 + $0x1808] sm:$0xff]
    %v856 = vld [vmem:[#allocation5 + $0x1810] sm:$0xff]
    %v857 = vld [vmem:[#allocation5 + $0x1818] sm:$0xff]
    %v858 = vld [vmem:[#allocation5 + $0x1820] sm:$0xff]
    %v859 = vld [vmem:[#allocation5 + $0x1828] sm:$0xff]
    %v860 = vld [vmem:[#allocation5 + $0x1830] sm:$0xff]
    %v861 = vld [vmem:[#allocation5 + $0x1838] sm:$0xff]
    %v862 = vld [vmem:[#allocation5 + $0x1840] sm:$0xff]
    %v863 = vld [vmem:[#allocation5 + $0x1848] sm:$0xff]
    %v864 = vld [vmem:[#allocation5 + $0x1850] sm:$0xff]
    %v865 = vld [vmem:[#allocation5 + $0x1858] sm:$0xff]
    %v866 = vld [vmem:[#allocation5 + $0x1860] sm:$0xff]
    %v867 = vld [vmem:[#allocation5 + $0x1868] sm:$0xff]
    %v868 = vld [vmem:[#allocation5 + $0x1870] sm:$0xff]
    %v869 = vld [vmem:[#allocation5 + $0x1878] sm:$0xff]
    %v870 = vld [vmem:[#allocation5 + $0x1880] sm:$0xff]
    %v871 = vld [vmem:[#allocation5 + $0x1888] sm:$0xff]
    %v872 = vld [vmem:[#allocation5 + $0x1890] sm:$0xff]
    %v873 = vld [vmem:[#allocation5 + $0x1898] sm:$0xff]
    %v874 = vld [vmem:[#allocation5 + $0x18a0] sm:$0xff]
    %v875 = vld [vmem:[#allocation5 + $0x18a8] sm:$0xff]
    %v876 = vld [vmem:[#allocation5 + $0x18b0] sm:$0xff]
    %v877 = vld [vmem:[#allocation5 + $0x18b8] sm:$0xff]
    %v878 = vld [vmem:[#allocation5 + $0x18c0] sm:$0xff]
    %v879 = vld [vmem:[#allocation5 + $0x18c8] sm:$0xff]
    %v880 = vld [vmem:[#allocation5 + $0x18d0] sm:$0xff]
    %v881 = vld [vmem:[#allocation5 + $0x18d8] sm:$0xff]
    %v882 = vld [vmem:[#allocation5 + $0x18e0] sm:$0xff]
    %v883 = vld [vmem:[#allocation5 + $0x18e8] sm:$0xff]
    %v884 = vld [vmem:[#allocation5 + $0x18f0] sm:$0xff]
    %v885 = vld [vmem:[#allocation5 + $0x18f8] sm:$0xff]
    %v886 = vld [vmem:[#allocation5 + $0x1900] sm:$0xff]
    %v887 = vld [vmem:[#allocation5 + $0x1908] sm:$0xff]
    %v888 = vld [vmem:[#allocation5 + $0x1910] sm:$0xff]
    %v889 = vld [vmem:[#allocation5 + $0x1918] sm:$0xff]
    %v890 = vld [vmem:[#allocation5 + $0x1920] sm:$0xff]
    %v891 = vld [vmem:[#allocation5 + $0x1928] sm:$0xff]
    %v892 = vld [vmem:[#allocation5 + $0x1930] sm:$0xff]
    %v893 = vld [vmem:[#allocation5 + $0x1938] sm:$0xff]
    %v894 = vld [vmem:[#allocation5 + $0x1940] sm:$0xff]
    %v895 = vld [vmem:[#allocation5 + $0x1948] sm:$0xff]
    %v896 = vld [vmem:[#allocation5 + $0x1950] sm:$0xff]
    %v897 = vld [vmem:[#allocation5 + $0x1958] sm:$0xff]
    %v898 = vld [vmem:[#allocation5 + $0x1960] sm:$0xff]
    %v899 = vld [vmem:[#allocation5 + $0x1968] sm:$0xff]
    %v900 = vld [vmem:[#allocation5 + $0x1970] sm:$0xff]
    %v901 = vld [vmem:[#allocation5 + $0x1978] sm:$0xff]
    %v902 = vld [vmem:[#allocation5 + $0x1980] sm:$0xff]
    %v903 = vld [vmem:[#allocation5 + $0x1988] sm:$0xff]
    %v904 = vld [vmem:[#allocation5 + $0x1990] sm:$0xff]
    %v905 = vld [vmem:[#allocation5 + $0x1998] sm:$0xff]
    %v906 = vld [vmem:[#allocation5 + $0x19a0] sm:$0xff]
    %v907 = vld [vmem:[#allocation5 + $0x19a8] sm:$0xff]
    %v908 = vld [vmem:[#allocation5 + $0x19b0] sm:$0xff]
    %v909 = vld [vmem:[#allocation5 + $0x19b8] sm:$0xff]
    %v910 = vld [vmem:[#allocation5 + $0x19c0] sm:$0xff]
    %v911 = vld [vmem:[#allocation5 + $0x19c8] sm:$0xff]
    %v912 = vld [vmem:[#allocation5 + $0x19d0] sm:$0xff]
    %v913 = vld [vmem:[#allocation5 + $0x19d8] sm:$0xff]
    %v914 = vld [vmem:[#allocation5 + $0x19e0] sm:$0xff]
    %v915 = vld [vmem:[#allocation5 + $0x19e8] sm:$0xff]
    %v916 = vld [vmem:[#allocation5 + $0x19f0] sm:$0xff]
    %v917 = vld [vmem:[#allocation5 + $0x19f8] sm:$0xff]
    %v918 = vld [vmem:[#allocation5 + $0x1a00] sm:$0xff]
    %v919 = vld [vmem:[#allocation5 + $0x1a08] sm:$0xff]
    %v920 = vld [vmem:[#allocation5 + $0x1a10] sm:$0xff]
    %v921 = vld [vmem:[#allocation5 + $0x1a18] sm:$0xff]
    %v922 = vld [vmem:[#allocation5 + $0x1a20] sm:$0xff]
    %v923 = vld [vmem:[#allocation5 + $0x1a28] sm:$0xff]
    %v924 = vld [vmem:[#allocation5 + $0x1a30] sm:$0xff]
    %v925 = vld [vmem:[#allocation5 + $0x1a38] sm:$0xff]
    %v926 = vld [vmem:[#allocation5 + $0x1a40] sm:$0xff]
    %v927 = vld [vmem:[#allocation5 + $0x1a48] sm:$0xff]
    %v928 = vld [vmem:[#allocation5 + $0x1a50] sm:$0xff]
    %v929 = vld [vmem:[#allocation5 + $0x1a58] sm:$0xff]
    %v930 = vld [vmem:[#allocation5 + $0x1a60] sm:$0xff]
    %v931 = vld [vmem:[#allocation5 + $0x1a68] sm:$0xff]
    %v932 = vld [vmem:[#allocation5 + $0x1a70] sm:$0xff]
    %v933 = vld [vmem:[#allocation5 + $0x1a78] sm:$0xff]
    %v934 = vld [vmem:[#allocation5 + $0x1a80] sm:$0xff]
    %v935 = vld [vmem:[#allocation5 + $0x1a88] sm:$0xff]
    %v936 = vld [vmem:[#allocation5 + $0x1a90] sm:$0xff]
    %v937 = vld [vmem:[#allocation5 + $0x1a98] sm:$0xff]
    %v938 = vld [vmem:[#allocation5 + $0x1aa0] sm:$0xff]
    %v939 = vld [vmem:[#allocation5 + $0x1aa8] sm:$0xff]
    %v940 = vld [vmem:[#allocation5 + $0x1ab0] sm:$0xff]
    %v941 = vld [vmem:[#allocation5 + $0x1ab8] sm:$0xff]
    %v942 = vld [vmem:[#allocation5 + $0x1ac0] sm:$0xff]
    %v943 = vld [vmem:[#allocation5 + $0x1ac8] sm:$0xff]
    %v944 = vld [vmem:[#allocation5 + $0x1ad0] sm:$0xff]
    %v945 = vld [vmem:[#allocation5 + $0x1ad8] sm:$0xff]
    %v946 = vld [vmem:[#allocation5 + $0x1ae0] sm:$0xff]
    %v947 = vld [vmem:[#allocation5 + $0x1ae8] sm:$0xff]
    %v948 = vld [vmem:[#allocation5 + $0x1af0] sm:$0xff]
    %v949 = vld [vmem:[#allocation5 + $0x1af8] sm:$0xff]
    %v950 = vld [vmem:[#allocation5 + $0x1b00] sm:$0xff]
    %v951 = vld [vmem:[#allocation5 + $0x1b08] sm:$0xff]
    %v952 = vld [vmem:[#allocation5 + $0x1b10] sm:$0xff]
    %v953 = vld [vmem:[#allocation5 + $0x1b18] sm:$0xff]
    %v954 = vld [vmem:[#allocation5 + $0x1b20] sm:$0xff]
    %v955 = vld [vmem:[#allocation5 + $0x1b28] sm:$0xff]
    %v956 = vld [vmem:[#allocation5 + $0x1b30] sm:$0xff]
    %v957 = vld [vmem:[#allocation5 + $0x1b38] sm:$0xff]
    %v958 = vld [vmem:[#allocation5 + $0x1b40] sm:$0xff]
    %v959 = vld [vmem:[#allocation5 + $0x1b48] sm:$0xff]
    %v960 = vld [vmem:[#allocation5 + $0x1b50] sm:$0xff]
    %v961 = vld [vmem:[#allocation5 + $0x1b58] sm:$0xff]
    %v962 = vld [vmem:[#allocation5 + $0x1b60] sm:$0xff]
    %v963 = vld [vmem:[#allocation5 + $0x1b68] sm:$0xff]
    %v964 = vld [vmem:[#allocation5 + $0x1b70] sm:$0xff]
    %v965 = vld [vmem:[#allocation5 + $0x1b78] sm:$0xff]
    %v966 = vld [vmem:[#allocation5 + $0x1b80] sm:$0xff]
    %v967 = vld [vmem:[#allocation5 + $0x1b88] sm:$0xff]
    %v968 = vld [vmem:[#allocation5 + $0x1b90] sm:$0xff]
    %v969 = vld [vmem:[#allocation5 + $0x1b98] sm:$0xff]
    %v970 = vld [vmem:[#allocation5 + $0x1ba0] sm:$0xff]
    %v971 = vld [vmem:[#allocation5 + $0x1ba8] sm:$0xff]
    %v972 = vld [vmem:[#allocation5 + $0x1bb0] sm:$0xff]
    %v973 = vld [vmem:[#allocation5 + $0x1bb8] sm:$0xff]
    %v974 = vld [vmem:[#allocation5 + $0x1bc0] sm:$0xff]
    %v975 = vld [vmem:[#allocation5 + $0x1bc8] sm:$0xff]
    %v976 = vld [vmem:[#allocation5 + $0x1bd0] sm:$0xff]
    %v977 = vld [vmem:[#allocation5 + $0x1bd8] sm:$0xff]
    %v978 = vld [vmem:[#allocation5 + $0x1be0] sm:$0xff]
    %v979 = vld [vmem:[#allocation5 + $0x1be8] sm:$0xff]
    %v980 = vld [vmem:[#allocation5 + $0x1bf0] sm:$0xff]
    %v981 = vld [vmem:[#allocation5 + $0x1bf8] sm:$0xff]
    %v982 = vld [vmem:[#allocation5 + $0x1c00] sm:$0xff]
    %v983 = vld [vmem:[#allocation5 + $0x1c08] sm:$0xff]
    %v984 = vld [vmem:[#allocation5 + $0x1c10] sm:$0xff]
    %v985 = vld [vmem:[#allocation5 + $0x1c18] sm:$0xff]
    %v986 = vld [vmem:[#allocation5 + $0x1c20] sm:$0xff]
    %v987 = vld [vmem:[#allocation5 + $0x1c28] sm:$0xff]
    %v988 = vld [vmem:[#allocation5 + $0x1c30] sm:$0xff]
    %v989 = vld [vmem:[#allocation5 + $0x1c38] sm:$0xff]
    %v990 = vld [vmem:[#allocation5 + $0x1c40] sm:$0xff]
    %v991 = vld [vmem:[#allocation5 + $0x1c48] sm:$0xff]
    %v992 = vld [vmem:[#allocation5 + $0x1c50] sm:$0xff]
    %v993 = vld [vmem:[#allocation5 + $0x1c58] sm:$0xff]
    %v994 = vld [vmem:[#allocation5 + $0x1c60] sm:$0xff]
    %v995 = vld [vmem:[#allocation5 + $0x1c68] sm:$0xff]
    %v996 = vld [vmem:[#allocation5 + $0x1c70] sm:$0xff]
    %v997 = vld [vmem:[#allocation5 + $0x1c78] sm:$0xff]
    %v998 = vld [vmem:[#allocation5 + $0x1c80] sm:$0xff]
    %v999 = vld [vmem:[#allocation5 + $0x1c88] sm:$0xff]
    %v1000 = vld [vmem:[#allocation5 + $0x1c90] sm:$0xff]
    %v1001 = vld [vmem:[#allocation5 + $0x1c98] sm:$0xff]
    %v1002 = vld [vmem:[#allocation5 + $0x1ca0] sm:$0xff]
    %v1003 = vld [vmem:[#allocation5 + $0x1ca8] sm:$0xff]
    %v1004 = vld [vmem:[#allocation5 + $0x1cb0] sm:$0xff]
    %v1005 = vld [vmem:[#allocation5 + $0x1cb8] sm:$0xff]
    %v1006 = vld [vmem:[#allocation5 + $0x1cc0] sm:$0xff]
    %v1007 = vld [vmem:[#allocation5 + $0x1cc8] sm:$0xff]
    %v1008 = vld [vmem:[#allocation5 + $0x1cd0] sm:$0xff]
    %v1009 = vld [vmem:[#allocation5 + $0x1cd8] sm:$0xff]
    %v1010 = vld [vmem:[#allocation5 + $0x1ce0] sm:$0xff]
    %v1011 = vld [vmem:[#allocation5 + $0x1ce8] sm:$0xff]
    %v1012 = vld [vmem:[#allocation5 + $0x1cf0] sm:$0xff]
    %v1013 = vld [vmem:[#allocation5 + $0x1cf8] sm:$0xff]
    %v1014 = vld [vmem:[#allocation5 + $0x1d00] sm:$0xff]
    %v1015 = vld [vmem:[#allocation5 + $0x1d08] sm:$0xff]
    %v1016 = vld [vmem:[#allocation5 + $0x1d10] sm:$0xff]
    %v1017 = vld [vmem:[#allocation5 + $0x1d18] sm:$0xff]
    %v1018 = vld [vmem:[#allocation5 + $0x1d20] sm:$0xff]
    %v1019 = vld [vmem:[#allocation5 + $0x1d28] sm:$0xff]
    %v1020 = vld [vmem:[#allocation5 + $0x1d30] sm:$0xff]
    %v1021 = vld [vmem:[#allocation5 + $0x1d38] sm:$0xff]
    %v1022 = vld [vmem:[#allocation5 + $0x1d40] sm:$0xff]
    %v1023 = vld [vmem:[#allocation5 + $0x1d48] sm:$0xff]
    %v1024 = vld [vmem:[#allocation5 + $0x1d50] sm:$0xff]
    %v1025 = vld [vmem:[#allocation5 + $0x1d58] sm:$0xff]
    %v1026 = vld [vmem:[#allocation5 + $0x1d60] sm:$0xff]
    %v1027 = vld [vmem:[#allocation5 + $0x1d68] sm:$0xff]
    %v1028 = vld [vmem:[#allocation5 + $0x1d70] sm:$0xff]
    %v1029 = vld [vmem:[#allocation5 + $0x1d78] sm:$0xff]
    %v1030 = vld [vmem:[#allocation5 + $0x1d80] sm:$0xff]
    %v1031 = vld [vmem:[#allocation5 + $0x1d88] sm:$0xff]
    %v1032 = vld [vmem:[#allocation5 + $0x1d90] sm:$0xff]
    %v1033 = vld [vmem:[#allocation5 + $0x1d98] sm:$0xff]
    %v1034 = vld [vmem:[#allocation5 + $0x1da0] sm:$0xff]
    %v1035 = vld [vmem:[#allocation5 + $0x1da8] sm:$0xff]
    %v1036 = vld [vmem:[#allocation5 + $0x1db0] sm:$0xff]
    %v1037 = vld [vmem:[#allocation5 + $0x1db8] sm:$0xff]
    %v1038 = vld [vmem:[#allocation5 + $0x1dc0] sm:$0xff]
    %v1039 = vld [vmem:[#allocation5 + $0x1dc8] sm:$0xff]
    %v1040 = vld [vmem:[#allocation5 + $0x1dd0] sm:$0xff]
    %v1041 = vld [vmem:[#allocation5 + $0x1dd8] sm:$0xff]
    %v1042 = vld [vmem:[#allocation5 + $0x1de0] sm:$0xff]
    %v1043 = vld [vmem:[#allocation5 + $0x1de8] sm:$0xff]
    %v1044 = vld [vmem:[#allocation5 + $0x1df0] sm:$0xff]
    %v1045 = vld [vmem:[#allocation5 + $0x1df8] sm:$0xff]
    %v1046 = vld [vmem:[#allocation5 + $0x1e00] sm:$0xff]
    %v1047 = vld [vmem:[#allocation5 + $0x1e08] sm:$0xff]
    %v1048 = vld [vmem:[#allocation5 + $0x1e10] sm:$0xff]
    %v1049 = vld [vmem:[#allocation5 + $0x1e18] sm:$0xff]
    %v1050 = vld [vmem:[#allocation5 + $0x1e20] sm:$0xff]
    %v1051 = vld [vmem:[#allocation5 + $0x1e28] sm:$0xff]
    %v1052 = vld [vmem:[#allocation5 + $0x1e30] sm:$0xff]
    %v1053 = vld [vmem:[#allocation5 + $0x1e38] sm:$0xff]
    %v1054 = vld [vmem:[#allocation5 + $0x1e40] sm:$0xff]
    %v1055 = vld [vmem:[#allocation5 + $0x1e48] sm:$0xff]
    %v1056 = vld [vmem:[#allocation5 + $0x1e50] sm:$0xff]
    %v1057 = vld [vmem:[#allocation5 + $0x1e58] sm:$0xff]
    %v1058 = vld [vmem:[#allocation5 + $0x1e60] sm:$0xff]
    %v1059 = vld [vmem:[#allocation5 + $0x1e68] sm:$0xff]
    %v1060 = vld [vmem:[#allocation5 + $0x1e70] sm:$0xff]
    %v1061 = vld [vmem:[#allocation5 + $0x1e78] sm:$0xff]
    %v1062 = vld [vmem:[#allocation5 + $0x1e80] sm:$0xff]
    %v1063 = vld [vmem:[#allocation5 + $0x1e88] sm:$0xff]
    %v1064 = vld [vmem:[#allocation5 + $0x1e90] sm:$0xff]
    %v1065 = vld [vmem:[#allocation5 + $0x1e98] sm:$0xff]
    %v1066 = vld [vmem:[#allocation5 + $0x1ea0] sm:$0xff]
    %v1067 = vld [vmem:[#allocation5 + $0x1ea8] sm:$0xff]
    %v1068 = vld [vmem:[#allocation5 + $0x1eb0] sm:$0xff]
    %v1069 = vld [vmem:[#allocation5 + $0x1eb8] sm:$0xff]
    %v1070 = vld [vmem:[#allocation5 + $0x1ec0] sm:$0xff]
    %v1071 = vld [vmem:[#allocation5 + $0x1ec8] sm:$0xff]
    %v1072 = vld [vmem:[#allocation5 + $0x1ed0] sm:$0xff]
    %v1073 = vld [vmem:[#allocation5 + $0x1ed8] sm:$0xff]
    %v1074 = vld [vmem:[#allocation5 + $0x1ee0] sm:$0xff]
    %v1075 = vld [vmem:[#allocation5 + $0x1ee8] sm:$0xff]
    %v1076 = vld [vmem:[#allocation5 + $0x1ef0] sm:$0xff]
    %v1077 = vld [vmem:[#allocation5 + $0x1ef8] sm:$0xff]
    %v1078 = vld [vmem:[#allocation5 + $0x1f00] sm:$0xff]
    %v1079 = vld [vmem:[#allocation5 + $0x1f08] sm:$0xff]
    %v1080 = vld [vmem:[#allocation5 + $0x1f10] sm:$0xff]
    %v1081 = vld [vmem:[#allocation5 + $0x1f18] sm:$0xff]
    %v1082 = vld [vmem:[#allocation5 + $0x1f20] sm:$0xff]
    %v1083 = vld [vmem:[#allocation5 + $0x1f28] sm:$0xff]
    %v1084 = vld [vmem:[#allocation5 + $0x1f30] sm:$0xff]
    %v1085 = vld [vmem:[#allocation5 + $0x1f38] sm:$0xff]
    %v1086 = vld [vmem:[#allocation5 + $0x1f40] sm:$0xff]
    %v1087 = vld [vmem:[#allocation5 + $0x1f48] sm:$0xff]
    %v1088 = vld [vmem:[#allocation5 + $0x1f50] sm:$0xff]
    %v1089 = vld [vmem:[#allocation5 + $0x1f58] sm:$0xff]
    %v1090 = vld [vmem:[#allocation5 + $0x1f60] sm:$0xff]
    %v1091 = vld [vmem:[#allocation5 + $0x1f68] sm:$0xff]
    %v1092 = vld [vmem:[#allocation5 + $0x1f70] sm:$0xff]
    %v1093 = vld [vmem:[#allocation5 + $0x1f78] sm:$0xff]
    %v1094 = vld [vmem:[#allocation5 + $0x1f80] sm:$0xff]
    %v1095 = vld [vmem:[#allocation5 + $0x1f88] sm:$0xff]
    %v1096 = vld [vmem:[#allocation5 + $0x1f90] sm:$0xff]
    %v1097 = vld [vmem:[#allocation5 + $0x1f98] sm:$0xff]
    %v1098 = vld [vmem:[#allocation5 + $0x1fa0] sm:$0xff]
    %v1099 = vld [vmem:[#allocation5 + $0x1fa8] sm:$0xff]
    %v1100 = vld [vmem:[#allocation5 + $0x1fb0] sm:$0xff]
    %v1101 = vld [vmem:[#allocation5 + $0x1fb8] sm:$0xff]
    %v1102 = vld [vmem:[#allocation5 + $0x1fc0] sm:$0xff]
    %v1103 = vld [vmem:[#allocation5 + $0x1fc8] sm:$0xff]
    %v1104 = vld [vmem:[#allocation5 + $0x1fd0] sm:$0xff]
    %v1105 = vld [vmem:[#allocation5 + $0x1fd8] sm:$0xff]
    %v1106 = vld [vmem:[#allocation5 + $0x1fe0] sm:$0xff]
    %v1107 = vld [vmem:[#allocation5 + $0x1fe8] sm:$0xff]
    %v1108 = vld [vmem:[#allocation5 + $0x1ff0] sm:$0xff]
    %v1109 = vld [vmem:[#allocation5 + $0x1ff8] sm:$0xff]
    %v1110 = vld [vmem:[#allocation7] sm:$0x3]
    %v1112 = vlaneseq
    %v1113 = vshrl.u32 %v1112, 7
    %v1114 = vsub.s32 0, %v1113
    %v1115 = vrot.slane %v1110, %v1114
    %v1116 = vlaneseq
    %v1117 = vshrl.u32 %v1116, 7
    %v1118 = vsub.s32 1, %v1117
    %v1119 = vrot.slane %v1110, %v1118
    %v1154 = vcombine.low %v54, %v62
    %v1155 = vcombine.high %v54, %v62
    %v1156 = vcombine.low %v70, %v78
    %v1157 = vcombine.high %v70, %v78
    %v1159 = vunpack.c.l.s4 1983009808
    %v1160 = vunpack.c.0.s8 %v1159
    %v1161 = vlaneseq
    %v1162 = vshrl.u32 %v1161, 7
    %v1163 = vsub.s32 %v1160, %v1162
    %v1164 = vrot.slane %v1154, %v1163
    %v1166 = vunpack.c.l.s4 1983009808
    %v1167 = vunpack.c.0.s8 %v1166
    %v1168 = vlaneseq
    %v1169 = vshrl.u32 %v1168, 7
    %v1170 = vsub.s32 %v1167, %v1169
    %v1171 = vrot.slane %v1155, %v1170
    %v1173 = vunpack.c.l.s4 1983009808
    %v1174 = vunpack.c.0.s8 %v1173
    %v1175 = vlaneseq
    %v1176 = vshrl.u32 %v1175, 7
    %v1177 = vsub.s32 %v1174, %v1176
    %v1178 = vrot.slane %v1156, %v1177
    %v1180 = vunpack.c.l.s4 1983009808
    %v1181 = vunpack.c.0.s8 %v1180
    %v1182 = vlaneseq
    %v1183 = vshrl.u32 %v1182, 7
    %v1184 = vsub.s32 %v1181, %v1183
    %v1185 = vrot.slane %v1157, %v1184
    %v1186 = vcombine.low %v1164, %v1178
    %v1187 = vcombine.high %v1164, %v1178
    %v1188 = vcombine.low %v1171, %v1185
    %v1189 = vcombine.high %v1171, %v1185
    %v1190 = vcombine.low %v55, %v63
    %v1191 = vcombine.high %v55, %v63
    %v1192 = vcombine.low %v71, %v79
    %v1193 = vcombine.high %v71, %v79
    %v1195 = vunpack.c.l.s4 1983009808
    %v1196 = vunpack.c.0.s8 %v1195
    %v1197 = vlaneseq
    %v1198 = vshrl.u32 %v1197, 7
    %v1199 = vsub.s32 %v1196, %v1198
    %v1200 = vrot.slane %v1190, %v1199
    %v1202 = vunpack.c.l.s4 1983009808
    %v1203 = vunpack.c.0.s8 %v1202
    %v1204 = vlaneseq
    %v1205 = vshrl.u32 %v1204, 7
    %v1206 = vsub.s32 %v1203, %v1205
    %v1207 = vrot.slane %v1191, %v1206
    %v1209 = vunpack.c.l.s4 1983009808
    %v1210 = vunpack.c.0.s8 %v1209
    %v1211 = vlaneseq
    %v1212 = vshrl.u32 %v1211, 7
    %v1213 = vsub.s32 %v1210, %v1212
    %v1214 = vrot.slane %v1192, %v1213
    %v1216 = vunpack.c.l.s4 1983009808
    %v1217 = vunpack.c.0.s8 %v1216
    %v1218 = vlaneseq
    %v1219 = vshrl.u32 %v1218, 7
    %v1220 = vsub.s32 %v1217, %v1219
    %v1221 = vrot.slane %v1193, %v1220
    %v1222 = vcombine.low %v1200, %v1214
    %v1223 = vcombine.high %v1200, %v1214
    %v1224 = vcombine.low %v1207, %v1221
    %v1225 = vcombine.high %v1207, %v1221
    %v1226 = vcombine.low %v56, %v64
    %v1227 = vcombine.high %v56, %v64
    %v1228 = vcombine.low %v72, %v80
    %v1229 = vcombine.high %v72, %v80
    %v1231 = vunpack.c.l.s4 1983009808
    %v1232 = vunpack.c.0.s8 %v1231
    %v1233 = vlaneseq
    %v1234 = vshrl.u32 %v1233, 7
    %v1235 = vsub.s32 %v1232, %v1234
    %v1236 = vrot.slane %v1226, %v1235
    %v1238 = vunpack.c.l.s4 1983009808
    %v1239 = vunpack.c.0.s8 %v1238
    %v1240 = vlaneseq
    %v1241 = vshrl.u32 %v1240, 7
    %v1242 = vsub.s32 %v1239, %v1241
    %v1243 = vrot.slane %v1227, %v1242
    %v1245 = vunpack.c.l.s4 1983009808
    %v1246 = vunpack.c.0.s8 %v1245
    %v1247 = vlaneseq
    %v1248 = vshrl.u32 %v1247, 7
    %v1249 = vsub.s32 %v1246, %v1248
    %v1250 = vrot.slane %v1228, %v1249
    %v1252 = vunpack.c.l.s4 1983009808
    %v1253 = vunpack.c.0.s8 %v1252
    %v1254 = vlaneseq
    %v1255 = vshrl.u32 %v1254, 7
    %v1256 = vsub.s32 %v1253, %v1255
    %v1257 = vrot.slane %v1229, %v1256
    %v1258 = vcombine.low %v1236, %v1250
    %v1259 = vcombine.high %v1236, %v1250
    %v1260 = vcombine.low %v1243, %v1257
    %v1261 = vcombine.high %v1243, %v1257
    %v1262 = vcombine.low %v57, %v65
    %v1263 = vcombine.high %v57, %v65
    %v1264 = vcombine.low %v73, %v81
    %v1265 = vcombine.high %v73, %v81
    %v1267 = vunpack.c.l.s4 1983009808
    %v1268 = vunpack.c.0.s8 %v1267
    %v1269 = vlaneseq
    %v1270 = vshrl.u32 %v1269, 7
    %v1271 = vsub.s32 %v1268, %v1270
    %v1272 = vrot.slane %v1262, %v1271
    %v1274 = vunpack.c.l.s4 1983009808
    %v1275 = vunpack.c.0.s8 %v1274
    %v1276 = vlaneseq
    %v1277 = vshrl.u32 %v1276, 7
    %v1278 = vsub.s32 %v1275, %v1277
    %v1279 = vrot.slane %v1263, %v1278
    %v1281 = vunpack.c.l.s4 1983009808
    %v1282 = vunpack.c.0.s8 %v1281
    %v1283 = vlaneseq
    %v1284 = vshrl.u32 %v1283, 7
    %v1285 = vsub.s32 %v1282, %v1284
    %v1286 = vrot.slane %v1264, %v1285
    %v1288 = vunpack.c.l.s4 1983009808
    %v1289 = vunpack.c.0.s8 %v1288
    %v1290 = vlaneseq
    %v1291 = vshrl.u32 %v1290, 7
    %v1292 = vsub.s32 %v1289, %v1291
    %v1293 = vrot.slane %v1265, %v1292
    %v1294 = vcombine.low %v1272, %v1286
    %v1295 = vcombine.high %v1272, %v1286
    %v1296 = vcombine.low %v1279, %v1293
    %v1297 = vcombine.high %v1279, %v1293
    %v1298 = vcombine.low %v58, %v66
    %v1299 = vcombine.high %v58, %v66
    %v1300 = vcombine.low %v74, %v82
    %v1301 = vcombine.high %v74, %v82
    %v1303 = vunpack.c.l.s4 1983009808
    %v1304 = vunpack.c.0.s8 %v1303
    %v1305 = vlaneseq
    %v1306 = vshrl.u32 %v1305, 7
    %v1307 = vsub.s32 %v1304, %v1306
    %v1308 = vrot.slane %v1298, %v1307
    %v1310 = vunpack.c.l.s4 1983009808
    %v1311 = vunpack.c.0.s8 %v1310
    %v1312 = vlaneseq
    %v1313 = vshrl.u32 %v1312, 7
    %v1314 = vsub.s32 %v1311, %v1313
    %v1315 = vrot.slane %v1299, %v1314
    %v1317 = vunpack.c.l.s4 1983009808
    %v1318 = vunpack.c.0.s8 %v1317
    %v1319 = vlaneseq
    %v1320 = vshrl.u32 %v1319, 7
    %v1321 = vsub.s32 %v1318, %v1320
    %v1322 = vrot.slane %v1300, %v1321
    %v1324 = vunpack.c.l.s4 1983009808
    %v1325 = vunpack.c.0.s8 %v1324
    %v1326 = vlaneseq
    %v1327 = vshrl.u32 %v1326, 7
    %v1328 = vsub.s32 %v1325, %v1327
    %v1329 = vrot.slane %v1301, %v1328
    %v1330 = vcombine.low %v1308, %v1322
    %v1331 = vcombine.high %v1308, %v1322
    %v1332 = vcombine.low %v1315, %v1329
    %v1333 = vcombine.high %v1315, %v1329
    %v1334 = vcombine.low %v59, %v67
    %v1335 = vcombine.high %v59, %v67
    %v1336 = vcombine.low %v75, %v83
    %v1337 = vcombine.high %v75, %v83
    %v1339 = vunpack.c.l.s4 1983009808
    %v1340 = vunpack.c.0.s8 %v1339
    %v1341 = vlaneseq
    %v1342 = vshrl.u32 %v1341, 7
    %v1343 = vsub.s32 %v1340, %v1342
    %v1344 = vrot.slane %v1334, %v1343
    %v1346 = vunpack.c.l.s4 1983009808
    %v1347 = vunpack.c.0.s8 %v1346
    %v1348 = vlaneseq
    %v1349 = vshrl.u32 %v1348, 7
    %v1350 = vsub.s32 %v1347, %v1349
    %v1351 = vrot.slane %v1335, %v1350
    %v1353 = vunpack.c.l.s4 1983009808
    %v1354 = vunpack.c.0.s8 %v1353
    %v1355 = vlaneseq
    %v1356 = vshrl.u32 %v1355, 7
    %v1357 = vsub.s32 %v1354, %v1356
    %v1358 = vrot.slane %v1336, %v1357
    %v1360 = vunpack.c.l.s4 1983009808
    %v1361 = vunpack.c.0.s8 %v1360
    %v1362 = vlaneseq
    %v1363 = vshrl.u32 %v1362, 7
    %v1364 = vsub.s32 %v1361, %v1363
    %v1365 = vrot.slane %v1337, %v1364
    %v1366 = vcombine.low %v1344, %v1358
    %v1367 = vcombine.high %v1344, %v1358
    %v1368 = vcombine.low %v1351, %v1365
    %v1369 = vcombine.high %v1351, %v1365
    %v1370 = vcombine.low %v60, %v68
    %v1371 = vcombine.high %v60, %v68
    %v1372 = vcombine.low %v76, %v84
    %v1373 = vcombine.high %v76, %v84
    %v1375 = vunpack.c.l.s4 1983009808
    %v1376 = vunpack.c.0.s8 %v1375
    %v1377 = vlaneseq
    %v1378 = vshrl.u32 %v1377, 7
    %v1379 = vsub.s32 %v1376, %v1378
    %v1380 = vrot.slane %v1370, %v1379
    %v1382 = vunpack.c.l.s4 1983009808
    %v1383 = vunpack.c.0.s8 %v1382
    %v1384 = vlaneseq
    %v1385 = vshrl.u32 %v1384, 7
    %v1386 = vsub.s32 %v1383, %v1385
    %v1387 = vrot.slane %v1371, %v1386
    %v1389 = vunpack.c.l.s4 1983009808
    %v1390 = vunpack.c.0.s8 %v1389
    %v1391 = vlaneseq
    %v1392 = vshrl.u32 %v1391, 7
    %v1393 = vsub.s32 %v1390, %v1392
    %v1394 = vrot.slane %v1372, %v1393
    %v1396 = vunpack.c.l.s4 1983009808
    %v1397 = vunpack.c.0.s8 %v1396
    %v1398 = vlaneseq
    %v1399 = vshrl.u32 %v1398, 7
    %v1400 = vsub.s32 %v1397, %v1399
    %v1401 = vrot.slane %v1373, %v1400
    %v1402 = vcombine.low %v1380, %v1394
    %v1403 = vcombine.high %v1380, %v1394
    %v1404 = vcombine.low %v1387, %v1401
    %v1405 = vcombine.high %v1387, %v1401
    %v1406 = vcombine.low %v61, %v69
    %v1407 = vcombine.high %v61, %v69
    %v1408 = vcombine.low %v77, %v85
    %v1409 = vcombine.high %v77, %v85
    %v1411 = vunpack.c.l.s4 1983009808
    %v1412 = vunpack.c.0.s8 %v1411
    %v1413 = vlaneseq
    %v1414 = vshrl.u32 %v1413, 7
    %v1415 = vsub.s32 %v1412, %v1414
    %v1416 = vrot.slane %v1406, %v1415
    %v1418 = vunpack.c.l.s4 1983009808
    %v1419 = vunpack.c.0.s8 %v1418
    %v1420 = vlaneseq
    %v1421 = vshrl.u32 %v1420, 7
    %v1422 = vsub.s32 %v1419, %v1421
    %v1423 = vrot.slane %v1407, %v1422
    %v1425 = vunpack.c.l.s4 1983009808
    %v1426 = vunpack.c.0.s8 %v1425
    %v1427 = vlaneseq
    %v1428 = vshrl.u32 %v1427, 7
    %v1429 = vsub.s32 %v1426, %v1428
    %v1430 = vrot.slane %v1408, %v1429
    %v1432 = vunpack.c.l.s4 1983009808
    %v1433 = vunpack.c.0.s8 %v1432
    %v1434 = vlaneseq
    %v1435 = vshrl.u32 %v1434, 7
    %v1436 = vsub.s32 %v1433, %v1435
    %v1437 = vrot.slane %v1409, %v1436
    %v1438 = vcombine.low %v1416, %v1430
    %v1439 = vcombine.high %v1416, %v1430
    %v1440 = vcombine.low %v1423, %v1437
    %v1441 = vcombine.high %v1423, %v1437
    %1474 = vmatprep.subr.mxu0 %v117
    %1475 = vmatpush1.msra.mxu0 %v116
    %1476 = vmatprep.subr.mxu0 %v115
    %1477 = vmatpush1.msra.mxu0 %v114
    %1478 = vmatprep.subr.mxu0 %v113
    %1479 = vmatpush1.msra.mxu0 %v112
    %1480 = vmatprep.subr.mxu0 %v111
    %1481 = vmatpush1.msra.mxu0 %v110
    %1482 = vmatprep.subr.mxu0 %v109
    %1483 = vmatpush1.msra.mxu0 %v108
    %1484 = vmatprep.subr.mxu0 %v107
    %1485 = vmatpush1.msra.mxu0 %v106
    %1486 = vmatprep.subr.mxu0 %v105
    %1487 = vmatpush1.msra.mxu0 %v104
    %1488 = vmatprep.subr.mxu0 %v103
    %1489 = vmatpush1.msra.mxu0 %v102
    %1490 = vmatprep.subr.mxu0 %v101
    %1491 = vmatpush1.msra.mxu0 %v100
    %1492 = vmatprep.subr.mxu0 %v99
    %1493 = vmatpush1.msra.mxu0 %v98
    %1494 = vmatprep.subr.mxu0 %v97
    %1495 = vmatpush1.msra.mxu0 %v96
    %1496 = vmatprep.subr.mxu0 %v95
    %1497 = vmatpush1.msra.mxu0 %v94
    %1498 = vmatprep.subr.mxu0 %v93
    %1499 = vmatpush1.msra.mxu0 %v92
    %1500 = vmatprep.subr.mxu0 %v91
    %1501 = vmatpush1.msra.mxu0 %v90
    %1502 = vmatprep.subr.mxu0 %v89
    %1503 = vmatpush1.msra.mxu0 %v88
    %1504 = vmatprep.subr.mxu0 %v87
    %1505 = vmatpush1.msra.mxu0 %v86
    %1506 = vmatprep.subr.mxu0 %v149
    %1507 = vmatpush2.msra.mxu0 %v148
    %1508 = vmatprep.subr.mxu0 %v147
    %1509 = vmatpush2.msra.mxu0 %v146
    %1510 = vmatprep.subr.mxu0 %v145
    %1511 = vmatpush2.msra.mxu0 %v144
    %1512 = vmatprep.subr.mxu0 %v143
    %1513 = vmatpush2.msra.mxu0 %v142
    %1514 = vmatprep.subr.mxu0 %v141
    %1515 = vmatpush2.msra.mxu0 %v140
    %1516 = vmatprep.subr.mxu0 %v139
    %1517 = vmatpush2.msra.mxu0 %v138
    %1518 = vmatprep.subr.mxu0 %v137
    %1519 = vmatpush2.msra.mxu0 %v136
    %1520 = vmatprep.subr.mxu0 %v135
    %1521 = vmatpush2.msra.mxu0 %v134
    %1522 = vmatprep.subr.mxu0 %v133
    %1523 = vmatpush2.msra.mxu0 %v132
    %1524 = vmatprep.subr.mxu0 %v131
    %1525 = vmatpush2.msra.mxu0 %v130
    %1526 = vmatprep.subr.mxu0 %v129
    %1527 = vmatpush2.msra.mxu0 %v128
    %1528 = vmatprep.subr.mxu0 %v127
    %1529 = vmatpush2.msra.mxu0 %v126
    %1530 = vmatprep.subr.mxu0 %v125
    %1531 = vmatpush2.msra.mxu0 %v124
    %1532 = vmatprep.subr.mxu0 %v123
    %1533 = vmatpush2.msra.mxu0 %v122
    %1534 = vmatprep.subr.mxu0 %v121
    %1535 = vmatpush2.msra.mxu0 %v120
    %1536 = vmatprep.subr.mxu0 %v119
    %1537 = vmatpush2.msra.mxu0 %v118
    %1538 = vmatprep.mubr.f32.mxu0 %v1187
    %1539 = vmatmul.mubr.f32.gmra.mxu0 %v1186
    %v1540 = vpop.f32.mrf.mxu0
    %v1541 = vadd.f32 %v1115, %v1540
    %v1542 = vpop.f32.mrf.mxu0
    %v1543 = vadd.f32 %v1119, %v1542
    %1544 = vdwg.mxu0
    %1545 = vmatprep.subr.mxu0 %v181
    %1546 = vmatpush1.msra.mxu0 %v180
    %1547 = vmatprep.subr.mxu0 %v179
    %1548 = vmatpush1.msra.mxu0 %v178
    %1549 = vmatprep.subr.mxu0 %v177
    %1550 = vmatpush1.msra.mxu0 %v176
    %1551 = vmatprep.subr.mxu0 %v175
    %1552 = vmatpush1.msra.mxu0 %v174
    %1553 = vmatprep.subr.mxu0 %v173
    %1554 = vmatpush1.msra.mxu0 %v172
    %1555 = vmatprep.subr.mxu0 %v171
    %1556 = vmatpush1.msra.mxu0 %v170
    %1557 = vmatprep.subr.mxu0 %v169
    %1558 = vmatpush1.msra.mxu0 %v168
    %1559 = vmatprep.subr.mxu0 %v167
    %1560 = vmatpush1.msra.mxu0 %v166
    %1561 = vmatprep.subr.mxu0 %v165
    %1562 = vmatpush1.msra.mxu0 %v164
    %1563 = vmatprep.subr.mxu0 %v163
    %1564 = vmatpush1.msra.mxu0 %v162
    %1565 = vmatprep.subr.mxu0 %v161
    %1566 = vmatpush1.msra.mxu0 %v160
    %1567 = vmatprep.subr.mxu0 %v159
    %1568 = vmatpush1.msra.mxu0 %v158
    %1569 = vmatprep.subr.mxu0 %v157
    %1570 = vmatpush1.msra.mxu0 %v156
    %1571 = vmatprep.subr.mxu0 %v155
    %1572 = vmatpush1.msra.mxu0 %v154
    %1573 = vmatprep.subr.mxu0 %v153
    %1574 = vmatpush1.msra.mxu0 %v152
    %1575 = vmatprep.subr.mxu0 %v151
    %1576 = vmatpush1.msra.mxu0 %v150
    %1577 = vmatprep.subr.mxu0 %v213
    %1578 = vmatpush2.msra.mxu0 %v212
    %1579 = vmatprep.subr.mxu0 %v211
    %1580 = vmatpush2.msra.mxu0 %v210
    %1581 = vmatprep.subr.mxu0 %v209
    %1582 = vmatpush2.msra.mxu0 %v208
    %1583 = vmatprep.subr.mxu0 %v207
    %1584 = vmatpush2.msra.mxu0 %v206
    %1585 = vmatprep.subr.mxu0 %v205
    %1586 = vmatpush2.msra.mxu0 %v204
    %1587 = vmatprep.subr.mxu0 %v203
    %1588 = vmatpush2.msra.mxu0 %v202
    %1589 = vmatprep.subr.mxu0 %v201
    %1590 = vmatpush2.msra.mxu0 %v200
    %1591 = vmatprep.subr.mxu0 %v199
    %1592 = vmatpush2.msra.mxu0 %v198
    %1593 = vmatprep.subr.mxu0 %v197
    %1594 = vmatpush2.msra.mxu0 %v196
    %1595 = vmatprep.subr.mxu0 %v195
    %1596 = vmatpush2.msra.mxu0 %v194
    %1597 = vmatprep.subr.mxu0 %v193
    %1598 = vmatpush2.msra.mxu0 %v192
    %1599 = vmatprep.subr.mxu0 %v191
    %1600 = vmatpush2.msra.mxu0 %v190
    %1601 = vmatprep.subr.mxu0 %v189
    %1602 = vmatpush2.msra.mxu0 %v188
    %1603 = vmatprep.subr.mxu0 %v187
    %1604 = vmatpush2.msra.mxu0 %v186
    %1605 = vmatprep.subr.mxu0 %v185
    %1606 = vmatpush2.msra.mxu0 %v184
    %1607 = vmatprep.subr.mxu0 %v183
    %1608 = vmatpush2.msra.mxu0 %v182
    %1609 = vmatprep.mubr.f32.mxu0 %v1189
    %1610 = vmatmul.mubr.f32.gmra.mxu0 %v1188
    %v1611 = vpop.f32.mrf.mxu0
    %v1612 = vadd.f32 %v1541, %v1611
    %v1613 = vpop.f32.mrf.mxu0
    %v1614 = vadd.f32 %v1543, %v1613
    %1615 = vdwg.mxu0
    %1616 = vmatprep.subr.mxu0 %v245
    %1617 = vmatpush1.msra.mxu0 %v244
    %1618 = vmatprep.subr.mxu0 %v243
    %1619 = vmatpush1.msra.mxu0 %v242
    %1620 = vmatprep.subr.mxu0 %v241
    %1621 = vmatpush1.msra.mxu0 %v240
    %1622 = vmatprep.subr.mxu0 %v239
    %1623 = vmatpush1.msra.mxu0 %v238
    %1624 = vmatprep.subr.mxu0 %v237
    %1625 = vmatpush1.msra.mxu0 %v236
    %1626 = vmatprep.subr.mxu0 %v235
    %1627 = vmatpush1.msra.mxu0 %v234
    %1628 = vmatprep.subr.mxu0 %v233
    %1629 = vmatpush1.msra.mxu0 %v232
    %1630 = vmatprep.subr.mxu0 %v231
    %1631 = vmatpush1.msra.mxu0 %v230
    %1632 = vmatprep.subr.mxu0 %v229
    %1633 = vmatpush1.msra.mxu0 %v228
    %1634 = vmatprep.subr.mxu0 %v227
    %1635 = vmatpush1.msra.mxu0 %v226
    %1636 = vmatprep.subr.mxu0 %v225
    %1637 = vmatpush1.msra.mxu0 %v224
    %1638 = vmatprep.subr.mxu0 %v223
    %1639 = vmatpush1.msra.mxu0 %v222
    %1640 = vmatprep.subr.mxu0 %v221
    %1641 = vmatpush1.msra.mxu0 %v220
    %1642 = vmatprep.subr.mxu0 %v219
    %1643 = vmatpush1.msra.mxu0 %v218
    %1644 = vmatprep.subr.mxu0 %v217
    %1645 = vmatpush1.msra.mxu0 %v216
    %1646 = vmatprep.subr.mxu0 %v215
    %1647 = vmatpush1.msra.mxu0 %v214
    %1648 = vmatprep.subr.mxu0 %v277
    %1649 = vmatpush2.msra.mxu0 %v276
    %1650 = vmatprep.subr.mxu0 %v275
    %1651 = vmatpush2.msra.mxu0 %v274
    %1652 = vmatprep.subr.mxu0 %v273
    %1653 = vmatpush2.msra.mxu0 %v272
    %1654 = vmatprep.subr.mxu0 %v271
    %1655 = vmatpush2.msra.mxu0 %v270
    %1656 = vmatprep.subr.mxu0 %v269
    %1657 = vmatpush2.msra.mxu0 %v268
    %1658 = vmatprep.subr.mxu0 %v267
    %1659 = vmatpush2.msra.mxu0 %v266
    %1660 = vmatprep.subr.mxu0 %v265
    %1661 = vmatpush2.msra.mxu0 %v264
    %1662 = vmatprep.subr.mxu0 %v263
    %1663 = vmatpush2.msra.mxu0 %v262
    %1664 = vmatprep.subr.mxu0 %v261
    %1665 = vmatpush2.msra.mxu0 %v260
    %1666 = vmatprep.subr.mxu0 %v259
    %1667 = vmatpush2.msra.mxu0 %v258
    %1668 = vmatprep.subr.mxu0 %v257
    %1669 = vmatpush2.msra.mxu0 %v256
    %1670 = vmatprep.subr.mxu0 %v255
    %1671 = vmatpush2.msra.mxu0 %v254
    %1672 = vmatprep.subr.mxu0 %v253
    %1673 = vmatpush2.msra.mxu0 %v252
    %1674 = vmatprep.subr.mxu0 %v251
    %1675 = vmatpush2.msra.mxu0 %v250
    %1676 = vmatprep.subr.mxu0 %v249
    %1677 = vmatpush2.msra.mxu0 %v248
    %1678 = vmatprep.subr.mxu0 %v247
    %1679 = vmatpush2.msra.mxu0 %v246
    %1680 = vmatprep.mubr.f32.mxu0 %v1223
    %1681 = vmatmul.mubr.f32.gmra.mxu0 %v1222
    %v1682 = vpop.f32.mrf.mxu0
    %v1683 = vadd.f32 %v1612, %v1682
    %v1684 = vpop.f32.mrf.mxu0
    %v1685 = vadd.f32 %v1614, %v1684
    %1686 = vdwg.mxu0
    %1687 = vmatprep.subr.mxu0 %v309
    %1688 = vmatpush1.msra.mxu0 %v308
    %1689 = vmatprep.subr.mxu0 %v307
    %1690 = vmatpush1.msra.mxu0 %v306
    %1691 = vmatprep.subr.mxu0 %v305
    %1692 = vmatpush1.msra.mxu0 %v304
    %1693 = vmatprep.subr.mxu0 %v303
    %1694 = vmatpush1.msra.mxu0 %v302
    %1695 = vmatprep.subr.mxu0 %v301
    %1696 = vmatpush1.msra.mxu0 %v300
    %1697 = vmatprep.subr.mxu0 %v299
    %1698 = vmatpush1.msra.mxu0 %v298
    %1699 = vmatprep.subr.mxu0 %v297
    %1700 = vmatpush1.msra.mxu0 %v296
    %1701 = vmatprep.subr.mxu0 %v295
    %1702 = vmatpush1.msra.mxu0 %v294
    %1703 = vmatprep.subr.mxu0 %v293
    %1704 = vmatpush1.msra.mxu0 %v292
    %1705 = vmatprep.subr.mxu0 %v291
    %1706 = vmatpush1.msra.mxu0 %v290
    %1707 = vmatprep.subr.mxu0 %v289
    %1708 = vmatpush1.msra.mxu0 %v288
    %1709 = vmatprep.subr.mxu0 %v287
    %1710 = vmatpush1.msra.mxu0 %v286
    %1711 = vmatprep.subr.mxu0 %v285
    %1712 = vmatpush1.msra.mxu0 %v284
    %1713 = vmatprep.subr.mxu0 %v283
    %1714 = vmatpush1.msra.mxu0 %v282
    %1715 = vmatprep.subr.mxu0 %v281
    %1716 = vmatpush1.msra.mxu0 %v280
    %1717 = vmatprep.subr.mxu0 %v279
    %1718 = vmatpush1.msra.mxu0 %v278
    %1719 = vmatprep.subr.mxu0 %v341
    %1720 = vmatpush2.msra.mxu0 %v340
    %1721 = vmatprep.subr.mxu0 %v339
    %1722 = vmatpush2.msra.mxu0 %v338
    %1723 = vmatprep.subr.mxu0 %v337
    %1724 = vmatpush2.msra.mxu0 %v336
    %1725 = vmatprep.subr.mxu0 %v335
    %1726 = vmatpush2.msra.mxu0 %v334
    %1727 = vmatprep.subr.mxu0 %v333
    %1728 = vmatpush2.msra.mxu0 %v332
    %1729 = vmatprep.subr.mxu0 %v331
    %1730 = vmatpush2.msra.mxu0 %v330
    %1731 = vmatprep.subr.mxu0 %v329
    %1732 = vmatpush2.msra.mxu0 %v328
    %1733 = vmatprep.subr.mxu0 %v327
    %1734 = vmatpush2.msra.mxu0 %v326
    %1735 = vmatprep.subr.mxu0 %v325
    %1736 = vmatpush2.msra.mxu0 %v324
    %1737 = vmatprep.subr.mxu0 %v323
    %1738 = vmatpush2.msra.mxu0 %v322
    %1739 = vmatprep.subr.mxu0 %v321
    %1740 = vmatpush2.msra.mxu0 %v320
    %1741 = vmatprep.subr.mxu0 %v319
    %1742 = vmatpush2.msra.mxu0 %v318
    %1743 = vmatprep.subr.mxu0 %v317
    %1744 = vmatpush2.msra.mxu0 %v316
    %1745 = vmatprep.subr.mxu0 %v315
    %1746 = vmatpush2.msra.mxu0 %v314
    %1747 = vmatprep.subr.mxu0 %v313
    %1748 = vmatpush2.msra.mxu0 %v312
    %1749 = vmatprep.subr.mxu0 %v311
    %1750 = vmatpush2.msra.mxu0 %v310
    %1751 = vmatprep.mubr.f32.mxu0 %v1225
    %1752 = vmatmul.mubr.f32.gmra.mxu0 %v1224
    %v1753 = vpop.f32.mrf.mxu0
    %v1754 = vadd.f32 %v1683, %v1753
    %v1755 = vpop.f32.mrf.mxu0
    %v1756 = vadd.f32 %v1685, %v1755
    %1757 = vdwg.mxu0
    %1758 = vmatprep.subr.mxu0 %v373
    %1759 = vmatpush1.msra.mxu0 %v372
    %1760 = vmatprep.subr.mxu0 %v371
    %1761 = vmatpush1.msra.mxu0 %v370
    %1762 = vmatprep.subr.mxu0 %v369
    %1763 = vmatpush1.msra.mxu0 %v368
    %1764 = vmatprep.subr.mxu0 %v367
    %1765 = vmatpush1.msra.mxu0 %v366
    %1766 = vmatprep.subr.mxu0 %v365
    %1767 = vmatpush1.msra.mxu0 %v364
    %1768 = vmatprep.subr.mxu0 %v363
    %1769 = vmatpush1.msra.mxu0 %v362
    %1770 = vmatprep.subr.mxu0 %v361
    %1771 = vmatpush1.msra.mxu0 %v360
    %1772 = vmatprep.subr.mxu0 %v359
    %1773 = vmatpush1.msra.mxu0 %v358
    %1774 = vmatprep.subr.mxu0 %v357
    %1775 = vmatpush1.msra.mxu0 %v356
    %1776 = vmatprep.subr.mxu0 %v355
    %1777 = vmatpush1.msra.mxu0 %v354
    %1778 = vmatprep.subr.mxu0 %v353
    %1779 = vmatpush1.msra.mxu0 %v352
    %1780 = vmatprep.subr.mxu0 %v351
    %1781 = vmatpush1.msra.mxu0 %v350
    %1782 = vmatprep.subr.mxu0 %v349
    %1783 = vmatpush1.msra.mxu0 %v348
    %1784 = vmatprep.subr.mxu0 %v347
    %1785 = vmatpush1.msra.mxu0 %v346
    %1786 = vmatprep.subr.mxu0 %v345
    %1787 = vmatpush1.msra.mxu0 %v344
    %1788 = vmatprep.subr.mxu0 %v343
    %1789 = vmatpush1.msra.mxu0 %v342
    %1790 = vmatprep.subr.mxu0 %v405
    %1791 = vmatpush2.msra.mxu0 %v404
    %1792 = vmatprep.subr.mxu0 %v403
    %1793 = vmatpush2.msra.mxu0 %v402
    %1794 = vmatprep.subr.mxu0 %v401
    %1795 = vmatpush2.msra.mxu0 %v400
    %1796 = vmatprep.subr.mxu0 %v399
    %1797 = vmatpush2.msra.mxu0 %v398
    %1798 = vmatprep.subr.mxu0 %v397
    %1799 = vmatpush2.msra.mxu0 %v396
    %1800 = vmatprep.subr.mxu0 %v395
    %1801 = vmatpush2.msra.mxu0 %v394
    %1802 = vmatprep.subr.mxu0 %v393
    %1803 = vmatpush2.msra.mxu0 %v392
    %1804 = vmatprep.subr.mxu0 %v391
    %1805 = vmatpush2.msra.mxu0 %v390
    %1806 = vmatprep.subr.mxu0 %v389
    %1807 = vmatpush2.msra.mxu0 %v388
    %1808 = vmatprep.subr.mxu0 %v387
    %1809 = vmatpush2.msra.mxu0 %v386
    %1810 = vmatprep.subr.mxu0 %v385
    %1811 = vmatpush2.msra.mxu0 %v384
    %1812 = vmatprep.subr.mxu0 %v383
    %1813 = vmatpush2.msra.mxu0 %v382
    %1814 = vmatprep.subr.mxu0 %v381
    %1815 = vmatpush2.msra.mxu0 %v380
    %1816 = vmatprep.subr.mxu0 %v379
    %1817 = vmatpush2.msra.mxu0 %v378
    %1818 = vmatprep.subr.mxu0 %v377
    %1819 = vmatpush2.msra.mxu0 %v376
    %1820 = vmatprep.subr.mxu0 %v375
    %1821 = vmatpush2.msra.mxu0 %v374
    %1822 = vmatprep.mubr.f32.mxu0 %v1259
    %1823 = vmatmul.mubr.f32.gmra.mxu0 %v1258
    %v1824 = vpop.f32.mrf.mxu0
    %v1825 = vadd.f32 %v1754, %v1824
    %v1826 = vpop.f32.mrf.mxu0
    %v1827 = vadd.f32 %v1756, %v1826
    %1828 = vdwg.mxu0
    %1829 = vmatprep.subr.mxu0 %v437
    %1830 = vmatpush1.msra.mxu0 %v436
    %1831 = vmatprep.subr.mxu0 %v435
    %1832 = vmatpush1.msra.mxu0 %v434
    %1833 = vmatprep.subr.mxu0 %v433
    %1834 = vmatpush1.msra.mxu0 %v432
    %1835 = vmatprep.subr.mxu0 %v431
    %1836 = vmatpush1.msra.mxu0 %v430
    %1837 = vmatprep.subr.mxu0 %v429
    %1838 = vmatpush1.msra.mxu0 %v428
    %1839 = vmatprep.subr.mxu0 %v427
    %1840 = vmatpush1.msra.mxu0 %v426
    %1841 = vmatprep.subr.mxu0 %v425
    %1842 = vmatpush1.msra.mxu0 %v424
    %1843 = vmatprep.subr.mxu0 %v423
    %1844 = vmatpush1.msra.mxu0 %v422
    %1845 = vmatprep.subr.mxu0 %v421
    %1846 = vmatpush1.msra.mxu0 %v420
    %1847 = vmatprep.subr.mxu0 %v419
    %1848 = vmatpush1.msra.mxu0 %v418
    %1849 = vmatprep.subr.mxu0 %v417
    %1850 = vmatpush1.msra.mxu0 %v416
    %1851 = vmatprep.subr.mxu0 %v415
    %1852 = vmatpush1.msra.mxu0 %v414
    %1853 = vmatprep.subr.mxu0 %v413
    %1854 = vmatpush1.msra.mxu0 %v412
    %1855 = vmatprep.subr.mxu0 %v411
    %1856 = vmatpush1.msra.mxu0 %v410
    %1857 = vmatprep.subr.mxu0 %v409
    %1858 = vmatpush1.msra.mxu0 %v408
    %1859 = vmatprep.subr.mxu0 %v407
    %1860 = vmatpush1.msra.mxu0 %v406
    %1861 = vmatprep.subr.mxu0 %v469
    %1862 = vmatpush2.msra.mxu0 %v468
    %1863 = vmatprep.subr.mxu0 %v467
    %1864 = vmatpush2.msra.mxu0 %v466
    %1865 = vmatprep.subr.mxu0 %v465
    %1866 = vmatpush2.msra.mxu0 %v464
    %1867 = vmatprep.subr.mxu0 %v463
    %1868 = vmatpush2.msra.mxu0 %v462
    %1869 = vmatprep.subr.mxu0 %v461
    %1870 = vmatpush2.msra.mxu0 %v460
    %1871 = vmatprep.subr.mxu0 %v459
    %1872 = vmatpush2.msra.mxu0 %v458
    %1873 = vmatprep.subr.mxu0 %v457
    %1874 = vmatpush2.msra.mxu0 %v456
    %1875 = vmatprep.subr.mxu0 %v455
    %1876 = vmatpush2.msra.mxu0 %v454
    %1877 = vmatprep.subr.mxu0 %v453
    %1878 = vmatpush2.msra.mxu0 %v452
    %1879 = vmatprep.subr.mxu0 %v451
    %1880 = vmatpush2.msra.mxu0 %v450
    %1881 = vmatprep.subr.mxu0 %v449
    %1882 = vmatpush2.msra.mxu0 %v448
    %1883 = vmatprep.subr.mxu0 %v447
    %1884 = vmatpush2.msra.mxu0 %v446
    %1885 = vmatprep.subr.mxu0 %v445
    %1886 = vmatpush2.msra.mxu0 %v444
    %1887 = vmatprep.subr.mxu0 %v443
    %1888 = vmatpush2.msra.mxu0 %v442
    %1889 = vmatprep.subr.mxu0 %v441
    %1890 = vmatpush2.msra.mxu0 %v440
    %1891 = vmatprep.subr.mxu0 %v439
    %1892 = vmatpush2.msra.mxu0 %v438
    %1893 = vmatprep.mubr.f32.mxu0 %v1261
    %1894 = vmatmul.mubr.f32.gmra.mxu0 %v1260
    %v1895 = vpop.f32.mrf.mxu0
    %v1896 = vadd.f32 %v1825, %v1895
    %v1897 = vpop.f32.mrf.mxu0
    %v1898 = vadd.f32 %v1827, %v1897
    %1899 = vdwg.mxu0
    %1900 = vmatprep.subr.mxu0 %v501
    %1901 = vmatpush1.msra.mxu0 %v500
    %1902 = vmatprep.subr.mxu0 %v499
    %1903 = vmatpush1.msra.mxu0 %v498
    %1904 = vmatprep.subr.mxu0 %v497
    %1905 = vmatpush1.msra.mxu0 %v496
    %1906 = vmatprep.subr.mxu0 %v495
    %1907 = vmatpush1.msra.mxu0 %v494
    %1908 = vmatprep.subr.mxu0 %v493
    %1909 = vmatpush1.msra.mxu0 %v492
    %1910 = vmatprep.subr.mxu0 %v491
    %1911 = vmatpush1.msra.mxu0 %v490
    %1912 = vmatprep.subr.mxu0 %v489
    %1913 = vmatpush1.msra.mxu0 %v488
    %1914 = vmatprep.subr.mxu0 %v487
    %1915 = vmatpush1.msra.mxu0 %v486
    %1916 = vmatprep.subr.mxu0 %v485
    %1917 = vmatpush1.msra.mxu0 %v484
    %1918 = vmatprep.subr.mxu0 %v483
    %1919 = vmatpush1.msra.mxu0 %v482
    %1920 = vmatprep.subr.mxu0 %v481
    %1921 = vmatpush1.msra.mxu0 %v480
    %1922 = vmatprep.subr.mxu0 %v479
    %1923 = vmatpush1.msra.mxu0 %v478
    %1924 = vmatprep.subr.mxu0 %v477
    %1925 = vmatpush1.msra.mxu0 %v476
    %1926 = vmatprep.subr.mxu0 %v475
    %1927 = vmatpush1.msra.mxu0 %v474
    %1928 = vmatprep.subr.mxu0 %v473
    %1929 = vmatpush1.msra.mxu0 %v472
    %1930 = vmatprep.subr.mxu0 %v471
    %1931 = vmatpush1.msra.mxu0 %v470
    %1932 = vmatprep.subr.mxu0 %v533
    %1933 = vmatpush2.msra.mxu0 %v532
    %1934 = vmatprep.subr.mxu0 %v531
    %1935 = vmatpush2.msra.mxu0 %v530
    %1936 = vmatprep.subr.mxu0 %v529
    %1937 = vmatpush2.msra.mxu0 %v528
    %1938 = vmatprep.subr.mxu0 %v527
    %1939 = vmatpush2.msra.mxu0 %v526
    %1940 = vmatprep.subr.mxu0 %v525
    %1941 = vmatpush2.msra.mxu0 %v524
    %1942 = vmatprep.subr.mxu0 %v523
    %1943 = vmatpush2.msra.mxu0 %v522
    %1944 = vmatprep.subr.mxu0 %v521
    %1945 = vmatpush2.msra.mxu0 %v520
    %1946 = vmatprep.subr.mxu0 %v519
    %1947 = vmatpush2.msra.mxu0 %v518
    %1948 = vmatprep.subr.mxu0 %v517
    %1949 = vmatpush2.msra.mxu0 %v516
    %1950 = vmatprep.subr.mxu0 %v515
    %1951 = vmatpush2.msra.mxu0 %v514
    %1952 = vmatprep.subr.mxu0 %v513
    %1953 = vmatpush2.msra.mxu0 %v512
    %1954 = vmatprep.subr.mxu0 %v511
    %1955 = vmatpush2.msra.mxu0 %v510
    %1956 = vmatprep.subr.mxu0 %v509
    %1957 = vmatpush2.msra.mxu0 %v508
    %1958 = vmatprep.subr.mxu0 %v507
    %1959 = vmatpush2.msra.mxu0 %v506
    %1960 = vmatprep.subr.mxu0 %v505
    %1961 = vmatpush2.msra.mxu0 %v504
    %1962 = vmatprep.subr.mxu0 %v503
    %1963 = vmatpush2.msra.mxu0 %v502
    %1964 = vmatprep.mubr.f32.mxu0 %v1295
    %1965 = vmatmul.mubr.f32.gmra.mxu0 %v1294
    %v1966 = vpop.f32.mrf.mxu0
    %v1967 = vadd.f32 %v1896, %v1966
    %v1968 = vpop.f32.mrf.mxu0
    %v1969 = vadd.f32 %v1898, %v1968
    %1970 = vdwg.mxu0
    %1971 = vmatprep.subr.mxu0 %v565
    %1972 = vmatpush1.msra.mxu0 %v564
    %1973 = vmatprep.subr.mxu0 %v563
    %1974 = vmatpush1.msra.mxu0 %v562
    %1975 = vmatprep.subr.mxu0 %v561
    %1976 = vmatpush1.msra.mxu0 %v560
    %1977 = vmatprep.subr.mxu0 %v559
    %1978 = vmatpush1.msra.mxu0 %v558
    %1979 = vmatprep.subr.mxu0 %v557
    %1980 = vmatpush1.msra.mxu0 %v556
    %1981 = vmatprep.subr.mxu0 %v555
    %1982 = vmatpush1.msra.mxu0 %v554
    %1983 = vmatprep.subr.mxu0 %v553
    %1984 = vmatpush1.msra.mxu0 %v552
    %1985 = vmatprep.subr.mxu0 %v551
    %1986 = vmatpush1.msra.mxu0 %v550
    %1987 = vmatprep.subr.mxu0 %v549
    %1988 = vmatpush1.msra.mxu0 %v548
    %1989 = vmatprep.subr.mxu0 %v547
    %1990 = vmatpush1.msra.mxu0 %v546
    %1991 = vmatprep.subr.mxu0 %v545
    %1992 = vmatpush1.msra.mxu0 %v544
    %1993 = vmatprep.subr.mxu0 %v543
    %1994 = vmatpush1.msra.mxu0 %v542
    %1995 = vmatprep.subr.mxu0 %v541
    %1996 = vmatpush1.msra.mxu0 %v540
    %1997 = vmatprep.subr.mxu0 %v539
    %1998 = vmatpush1.msra.mxu0 %v538
    %1999 = vmatprep.subr.mxu0 %v537
    %2000 = vmatpush1.msra.mxu0 %v536
    %2001 = vmatprep.subr.mxu0 %v535
    %2002 = vmatpush1.msra.mxu0 %v534
    %2003 = vmatprep.subr.mxu0 %v597
    %2004 = vmatpush2.msra.mxu0 %v596
    %2005 = vmatprep.subr.mxu0 %v595
    %2006 = vmatpush2.msra.mxu0 %v594
    %2007 = vmatprep.subr.mxu0 %v593
    %2008 = vmatpush2.msra.mxu0 %v592
    %2009 = vmatprep.subr.mxu0 %v591
    %2010 = vmatpush2.msra.mxu0 %v590
    %2011 = vmatprep.subr.mxu0 %v589
    %2012 = vmatpush2.msra.mxu0 %v588
    %2013 = vmatprep.subr.mxu0 %v587
    %2014 = vmatpush2.msra.mxu0 %v586
    %2015 = vmatprep.subr.mxu0 %v585
    %2016 = vmatpush2.msra.mxu0 %v584
    %2017 = vmatprep.subr.mxu0 %v583
    %2018 = vmatpush2.msra.mxu0 %v582
    %2019 = vmatprep.subr.mxu0 %v581
    %2020 = vmatpush2.msra.mxu0 %v580
    %2021 = vmatprep.subr.mxu0 %v579
    %2022 = vmatpush2.msra.mxu0 %v578
    %2023 = vmatprep.subr.mxu0 %v577
    %2024 = vmatpush2.msra.mxu0 %v576
    %2025 = vmatprep.subr.mxu0 %v575
    %2026 = vmatpush2.msra.mxu0 %v574
    %2027 = vmatprep.subr.mxu0 %v573
    %2028 = vmatpush2.msra.mxu0 %v572
    %2029 = vmatprep.subr.mxu0 %v571
    %2030 = vmatpush2.msra.mxu0 %v570
    %2031 = vmatprep.subr.mxu0 %v569
    %2032 = vmatpush2.msra.mxu0 %v568
    %2033 = vmatprep.subr.mxu0 %v567
    %2034 = vmatpush2.msra.mxu0 %v566
    %2035 = vmatprep.mubr.f32.mxu0 %v1297
    %2036 = vmatmul.mubr.f32.gmra.mxu0 %v1296
    %v2037 = vpop.f32.mrf.mxu0
    %v2038 = vadd.f32 %v1967, %v2037
    %v2039 = vpop.f32.mrf.mxu0
    %v2040 = vadd.f32 %v1969, %v2039
    %2041 = vdwg.mxu0
    %2042 = vmatprep.subr.mxu0 %v629
    %2043 = vmatpush1.msra.mxu0 %v628
    %2044 = vmatprep.subr.mxu0 %v627
    %2045 = vmatpush1.msra.mxu0 %v626
    %2046 = vmatprep.subr.mxu0 %v625
    %2047 = vmatpush1.msra.mxu0 %v624
    %2048 = vmatprep.subr.mxu0 %v623
    %2049 = vmatpush1.msra.mxu0 %v622
    %2050 = vmatprep.subr.mxu0 %v621
    %2051 = vmatpush1.msra.mxu0 %v620
    %2052 = vmatprep.subr.mxu0 %v619
    %2053 = vmatpush1.msra.mxu0 %v618
    %2054 = vmatprep.subr.mxu0 %v617
    %2055 = vmatpush1.msra.mxu0 %v616
    %2056 = vmatprep.subr.mxu0 %v615
    %2057 = vmatpush1.msra.mxu0 %v614
    %2058 = vmatprep.subr.mxu0 %v613
    %2059 = vmatpush1.msra.mxu0 %v612
    %2060 = vmatprep.subr.mxu0 %v611
    %2061 = vmatpush1.msra.mxu0 %v610
    %2062 = vmatprep.subr.mxu0 %v609
    %2063 = vmatpush1.msra.mxu0 %v608
    %2064 = vmatprep.subr.mxu0 %v607
    %2065 = vmatpush1.msra.mxu0 %v606
    %2066 = vmatprep.subr.mxu0 %v605
    %2067 = vmatpush1.msra.mxu0 %v604
    %2068 = vmatprep.subr.mxu0 %v603
    %2069 = vmatpush1.msra.mxu0 %v602
    %2070 = vmatprep.subr.mxu0 %v601
    %2071 = vmatpush1.msra.mxu0 %v600
    %2072 = vmatprep.subr.mxu0 %v599
    %2073 = vmatpush1.msra.mxu0 %v598
    %2074 = vmatprep.subr.mxu0 %v661
    %2075 = vmatpush2.msra.mxu0 %v660
    %2076 = vmatprep.subr.mxu0 %v659
    %2077 = vmatpush2.msra.mxu0 %v658
    %2078 = vmatprep.subr.mxu0 %v657
    %2079 = vmatpush2.msra.mxu0 %v656
    %2080 = vmatprep.subr.mxu0 %v655
    %2081 = vmatpush2.msra.mxu0 %v654
    %2082 = vmatprep.subr.mxu0 %v653
    %2083 = vmatpush2.msra.mxu0 %v652
    %2084 = vmatprep.subr.mxu0 %v651
    %2085 = vmatpush2.msra.mxu0 %v650
    %2086 = vmatprep.subr.mxu0 %v649
    %2087 = vmatpush2.msra.mxu0 %v648
    %2088 = vmatprep.subr.mxu0 %v647
    %2089 = vmatpush2.msra.mxu0 %v646
    %2090 = vmatprep.subr.mxu0 %v645
    %2091 = vmatpush2.msra.mxu0 %v644
    %2092 = vmatprep.subr.mxu0 %v643
    %2093 = vmatpush2.msra.mxu0 %v642
    %2094 = vmatprep.subr.mxu0 %v641
    %2095 = vmatpush2.msra.mxu0 %v640
    %2096 = vmatprep.subr.mxu0 %v639
    %2097 = vmatpush2.msra.mxu0 %v638
    %2098 = vmatprep.subr.mxu0 %v637
    %2099 = vmatpush2.msra.mxu0 %v636
    %2100 = vmatprep.subr.mxu0 %v635
    %2101 = vmatpush2.msra.mxu0 %v634
    %2102 = vmatprep.subr.mxu0 %v633
    %2103 = vmatpush2.msra.mxu0 %v632
    %2104 = vmatprep.subr.mxu0 %v631
    %2105 = vmatpush2.msra.mxu0 %v630
    %2106 = vmatprep.mubr.f32.mxu0 %v1331
    %2107 = vmatmul.mubr.f32.gmra.mxu0 %v1330
    %v2108 = vpop.f32.mrf.mxu0
    %v2109 = vadd.f32 %v2038, %v2108
    %v2110 = vpop.f32.mrf.mxu0
    %v2111 = vadd.f32 %v2040, %v2110
    %2112 = vdwg.mxu0
    %2113 = vmatprep.subr.mxu0 %v693
    %2114 = vmatpush1.msra.mxu0 %v692
    %2115 = vmatprep.subr.mxu0 %v691
    %2116 = vmatpush1.msra.mxu0 %v690
    %2117 = vmatprep.subr.mxu0 %v689
    %2118 = vmatpush1.msra.mxu0 %v688
    %2119 = vmatprep.subr.mxu0 %v687
    %2120 = vmatpush1.msra.mxu0 %v686
    %2121 = vmatprep.subr.mxu0 %v685
    %2122 = vmatpush1.msra.mxu0 %v684
    %2123 = vmatprep.subr.mxu0 %v683
    %2124 = vmatpush1.msra.mxu0 %v682
    %2125 = vmatprep.subr.mxu0 %v681
    %2126 = vmatpush1.msra.mxu0 %v680
    %2127 = vmatprep.subr.mxu0 %v679
    %2128 = vmatpush1.msra.mxu0 %v678
    %2129 = vmatprep.subr.mxu0 %v677
    %2130 = vmatpush1.msra.mxu0 %v676
    %2131 = vmatprep.subr.mxu0 %v675
    %2132 = vmatpush1.msra.mxu0 %v674
    %2133 = vmatprep.subr.mxu0 %v673
    %2134 = vmatpush1.msra.mxu0 %v672
    %2135 = vmatprep.subr.mxu0 %v671
    %2136 = vmatpush1.msra.mxu0 %v670
    %2137 = vmatprep.subr.mxu0 %v669
    %2138 = vmatpush1.msra.mxu0 %v668
    %2139 = vmatprep.subr.mxu0 %v667
    %2140 = vmatpush1.msra.mxu0 %v666
    %2141 = vmatprep.subr.mxu0 %v665
    %2142 = vmatpush1.msra.mxu0 %v664
    %2143 = vmatprep.subr.mxu0 %v663
    %2144 = vmatpush1.msra.mxu0 %v662
    %2145 = vmatprep.subr.mxu0 %v725
    %2146 = vmatpush2.msra.mxu0 %v724
    %2147 = vmatprep.subr.mxu0 %v723
    %2148 = vmatpush2.msra.mxu0 %v722
    %2149 = vmatprep.subr.mxu0 %v721
    %2150 = vmatpush2.msra.mxu0 %v720
    %2151 = vmatprep.subr.mxu0 %v719
    %2152 = vmatpush2.msra.mxu0 %v718
    %2153 = vmatprep.subr.mxu0 %v717
    %2154 = vmatpush2.msra.mxu0 %v716
    %2155 = vmatprep.subr.mxu0 %v715
    %2156 = vmatpush2.msra.mxu0 %v714
    %2157 = vmatprep.subr.mxu0 %v713
    %2158 = vmatpush2.msra.mxu0 %v712
    %2159 = vmatprep.subr.mxu0 %v711
    %2160 = vmatpush2.msra.mxu0 %v710
    %2161 = vmatprep.subr.mxu0 %v709
    %2162 = vmatpush2.msra.mxu0 %v708
    %2163 = vmatprep.subr.mxu0 %v707
    %2164 = vmatpush2.msra.mxu0 %v706
    %2165 = vmatprep.subr.mxu0 %v705
    %2166 = vmatpush2.msra.mxu0 %v704
    %2167 = vmatprep.subr.mxu0 %v703
    %2168 = vmatpush2.msra.mxu0 %v702
    %2169 = vmatprep.subr.mxu0 %v701
    %2170 = vmatpush2.msra.mxu0 %v700
    %2171 = vmatprep.subr.mxu0 %v699
    %2172 = vmatpush2.msra.mxu0 %v698
    %2173 = vmatprep.subr.mxu0 %v697
    %2174 = vmatpush2.msra.mxu0 %v696
    %2175 = vmatprep.subr.mxu0 %v695
    %2176 = vmatpush2.msra.mxu0 %v694
    %2177 = vmatprep.mubr.f32.mxu0 %v1333
    %2178 = vmatmul.mubr.f32.gmra.mxu0 %v1332
    %v2179 = vpop.f32.mrf.mxu0
    %v2180 = vadd.f32 %v2109, %v2179
    %v2181 = vpop.f32.mrf.mxu0
    %v2182 = vadd.f32 %v2111, %v2181
    %2183 = vdwg.mxu0
    %2184 = vmatprep.subr.mxu0 %v757
    %2185 = vmatpush1.msra.mxu0 %v756
    %2186 = vmatprep.subr.mxu0 %v755
    %2187 = vmatpush1.msra.mxu0 %v754
    %2188 = vmatprep.subr.mxu0 %v753
    %2189 = vmatpush1.msra.mxu0 %v752
    %2190 = vmatprep.subr.mxu0 %v751
    %2191 = vmatpush1.msra.mxu0 %v750
    %2192 = vmatprep.subr.mxu0 %v749
    %2193 = vmatpush1.msra.mxu0 %v748
    %2194 = vmatprep.subr.mxu0 %v747
    %2195 = vmatpush1.msra.mxu0 %v746
    %2196 = vmatprep.subr.mxu0 %v745
    %2197 = vmatpush1.msra.mxu0 %v744
    %2198 = vmatprep.subr.mxu0 %v743
    %2199 = vmatpush1.msra.mxu0 %v742
    %2200 = vmatprep.subr.mxu0 %v741
    %2201 = vmatpush1.msra.mxu0 %v740
    %2202 = vmatprep.subr.mxu0 %v739
    %2203 = vmatpush1.msra.mxu0 %v738
    %2204 = vmatprep.subr.mxu0 %v737
    %2205 = vmatpush1.msra.mxu0 %v736
    %2206 = vmatprep.subr.mxu0 %v735
    %2207 = vmatpush1.msra.mxu0 %v734
    %2208 = vmatprep.subr.mxu0 %v733
    %2209 = vmatpush1.msra.mxu0 %v732
    %2210 = vmatprep.subr.mxu0 %v731
    %2211 = vmatpush1.msra.mxu0 %v730
    %2212 = vmatprep.subr.mxu0 %v729
    %2213 = vmatpush1.msra.mxu0 %v728
    %2214 = vmatprep.subr.mxu0 %v727
    %2215 = vmatpush1.msra.mxu0 %v726
    %2216 = vmatprep.subr.mxu0 %v789
    %2217 = vmatpush2.msra.mxu0 %v788
    %2218 = vmatprep.subr.mxu0 %v787
    %2219 = vmatpush2.msra.mxu0 %v786
    %2220 = vmatprep.subr.mxu0 %v785
    %2221 = vmatpush2.msra.mxu0 %v784
    %2222 = vmatprep.subr.mxu0 %v783
    %2223 = vmatpush2.msra.mxu0 %v782
    %2224 = vmatprep.subr.mxu0 %v781
    %2225 = vmatpush2.msra.mxu0 %v780
    %2226 = vmatprep.subr.mxu0 %v779
    %2227 = vmatpush2.msra.mxu0 %v778
    %2228 = vmatprep.subr.mxu0 %v777
    %2229 = vmatpush2.msra.mxu0 %v776
    %2230 = vmatprep.subr.mxu0 %v775
    %2231 = vmatpush2.msra.mxu0 %v774
    %2232 = vmatprep.subr.mxu0 %v773
    %2233 = vmatpush2.msra.mxu0 %v772
    %2234 = vmatprep.subr.mxu0 %v771
    %2235 = vmatpush2.msra.mxu0 %v770
    %2236 = vmatprep.subr.mxu0 %v769
    %2237 = vmatpush2.msra.mxu0 %v768
    %2238 = vmatprep.subr.mxu0 %v767
    %2239 = vmatpush2.msra.mxu0 %v766
    %2240 = vmatprep.subr.mxu0 %v765
    %2241 = vmatpush2.msra.mxu0 %v764
    %2242 = vmatprep.subr.mxu0 %v763
    %2243 = vmatpush2.msra.mxu0 %v762
    %2244 = vmatprep.subr.mxu0 %v761
    %2245 = vmatpush2.msra.mxu0 %v760
    %2246 = vmatprep.subr.mxu0 %v759
    %2247 = vmatpush2.msra.mxu0 %v758
    %2248 = vmatprep.mubr.f32.mxu0 %v1367
    %2249 = vmatmul.mubr.f32.gmra.mxu0 %v1366
    %v2250 = vpop.f32.mrf.mxu0
    %v2251 = vadd.f32 %v2180, %v2250
    %v2252 = vpop.f32.mrf.mxu0
    %v2253 = vadd.f32 %v2182, %v2252
    %2254 = vdwg.mxu0
    %2255 = vmatprep.subr.mxu0 %v821
    %2256 = vmatpush1.msra.mxu0 %v820
    %2257 = vmatprep.subr.mxu0 %v819
    %2258 = vmatpush1.msra.mxu0 %v818
    %2259 = vmatprep.subr.mxu0 %v817
    %2260 = vmatpush1.msra.mxu0 %v816
    %2261 = vmatprep.subr.mxu0 %v815
    %2262 = vmatpush1.msra.mxu0 %v814
    %2263 = vmatprep.subr.mxu0 %v813
    %2264 = vmatpush1.msra.mxu0 %v812
    %2265 = vmatprep.subr.mxu0 %v811
    %2266 = vmatpush1.msra.mxu0 %v810
    %2267 = vmatprep.subr.mxu0 %v809
    %2268 = vmatpush1.msra.mxu0 %v808
    %2269 = vmatprep.subr.mxu0 %v807
    %2270 = vmatpush1.msra.mxu0 %v806
    %2271 = vmatprep.subr.mxu0 %v805
    %2272 = vmatpush1.msra.mxu0 %v804
    %2273 = vmatprep.subr.mxu0 %v803
    %2274 = vmatpush1.msra.mxu0 %v802
    %2275 = vmatprep.subr.mxu0 %v801
    %2276 = vmatpush1.msra.mxu0 %v800
    %2277 = vmatprep.subr.mxu0 %v799
    %2278 = vmatpush1.msra.mxu0 %v798
    %2279 = vmatprep.subr.mxu0 %v797
    %2280 = vmatpush1.msra.mxu0 %v796
    %2281 = vmatprep.subr.mxu0 %v795
    %2282 = vmatpush1.msra.mxu0 %v794
    %2283 = vmatprep.subr.mxu0 %v793
    %2284 = vmatpush1.msra.mxu0 %v792
    %2285 = vmatprep.subr.mxu0 %v791
    %2286 = vmatpush1.msra.mxu0 %v790
    %2287 = vmatprep.subr.mxu0 %v853
    %2288 = vmatpush2.msra.mxu0 %v852
    %2289 = vmatprep.subr.mxu0 %v851
    %2290 = vmatpush2.msra.mxu0 %v850
    %2291 = vmatprep.subr.mxu0 %v849
    %2292 = vmatpush2.msra.mxu0 %v848
    %2293 = vmatprep.subr.mxu0 %v847
    %2294 = vmatpush2.msra.mxu0 %v846
    %2295 = vmatprep.subr.mxu0 %v845
    %2296 = vmatpush2.msra.mxu0 %v844
    %2297 = vmatprep.subr.mxu0 %v843
    %2298 = vmatpush2.msra.mxu0 %v842
    %2299 = vmatprep.subr.mxu0 %v841
    %2300 = vmatpush2.msra.mxu0 %v840
    %2301 = vmatprep.subr.mxu0 %v839
    %2302 = vmatpush2.msra.mxu0 %v838
    %2303 = vmatprep.subr.mxu0 %v837
    %2304 = vmatpush2.msra.mxu0 %v836
    %2305 = vmatprep.subr.mxu0 %v835
    %2306 = vmatpush2.msra.mxu0 %v834
    %2307 = vmatprep.subr.mxu0 %v833
    %2308 = vmatpush2.msra.mxu0 %v832
    %2309 = vmatprep.subr.mxu0 %v831
    %2310 = vmatpush2.msra.mxu0 %v830
    %2311 = vmatprep.subr.mxu0 %v829
    %2312 = vmatpush2.msra.mxu0 %v828
    %2313 = vmatprep.subr.mxu0 %v827
    %2314 = vmatpush2.msra.mxu0 %v826
    %2315 = vmatprep.subr.mxu0 %v825
    %2316 = vmatpush2.msra.mxu0 %v824
    %2317 = vmatprep.subr.mxu0 %v823
    %2318 = vmatpush2.msra.mxu0 %v822
    %2319 = vmatprep.mubr.f32.mxu0 %v1369
    %2320 = vmatmul.mubr.f32.gmra.mxu0 %v1368
    %v2321 = vpop.f32.mrf.mxu0
    %v2322 = vadd.f32 %v2251, %v2321
    %v2323 = vpop.f32.mrf.mxu0
    %v2324 = vadd.f32 %v2253, %v2323
    %2325 = vdwg.mxu0
    %2326 = vmatprep.subr.mxu0 %v885
    %2327 = vmatpush1.msra.mxu0 %v884
    %2328 = vmatprep.subr.mxu0 %v883
    %2329 = vmatpush1.msra.mxu0 %v882
    %2330 = vmatprep.subr.mxu0 %v881
    %2331 = vmatpush1.msra.mxu0 %v880
    %2332 = vmatprep.subr.mxu0 %v879
    %2333 = vmatpush1.msra.mxu0 %v878
    %2334 = vmatprep.subr.mxu0 %v877
    %2335 = vmatpush1.msra.mxu0 %v876
    %2336 = vmatprep.subr.mxu0 %v875
    %2337 = vmatpush1.msra.mxu0 %v874
    %2338 = vmatprep.subr.mxu0 %v873
    %2339 = vmatpush1.msra.mxu0 %v872
    %2340 = vmatprep.subr.mxu0 %v871
    %2341 = vmatpush1.msra.mxu0 %v870
    %2342 = vmatprep.subr.mxu0 %v869
    %2343 = vmatpush1.msra.mxu0 %v868
    %2344 = vmatprep.subr.mxu0 %v867
    %2345 = vmatpush1.msra.mxu0 %v866
    %2346 = vmatprep.subr.mxu0 %v865
    %2347 = vmatpush1.msra.mxu0 %v864
    %2348 = vmatprep.subr.mxu0 %v863
    %2349 = vmatpush1.msra.mxu0 %v862
    %2350 = vmatprep.subr.mxu0 %v861
    %2351 = vmatpush1.msra.mxu0 %v860
    %2352 = vmatprep.subr.mxu0 %v859
    %2353 = vmatpush1.msra.mxu0 %v858
    %2354 = vmatprep.subr.mxu0 %v857
    %2355 = vmatpush1.msra.mxu0 %v856
    %2356 = vmatprep.subr.mxu0 %v855
    %2357 = vmatpush1.msra.mxu0 %v854
    %2358 = vmatprep.subr.mxu0 %v917
    %2359 = vmatpush2.msra.mxu0 %v916
    %2360 = vmatprep.subr.mxu0 %v915
    %2361 = vmatpush2.msra.mxu0 %v914
    %2362 = vmatprep.subr.mxu0 %v913
    %2363 = vmatpush2.msra.mxu0 %v912
    %2364 = vmatprep.subr.mxu0 %v911
    %2365 = vmatpush2.msra.mxu0 %v910
    %2366 = vmatprep.subr.mxu0 %v909
    %2367 = vmatpush2.msra.mxu0 %v908
    %2368 = vmatprep.subr.mxu0 %v907
    %2369 = vmatpush2.msra.mxu0 %v906
    %2370 = vmatprep.subr.mxu0 %v905
    %2371 = vmatpush2.msra.mxu0 %v904
    %2372 = vmatprep.subr.mxu0 %v903
    %2373 = vmatpush2.msra.mxu0 %v902
    %2374 = vmatprep.subr.mxu0 %v901
    %2375 = vmatpush2.msra.mxu0 %v900
    %2376 = vmatprep.subr.mxu0 %v899
    %2377 = vmatpush2.msra.mxu0 %v898
    %2378 = vmatprep.subr.mxu0 %v897
    %2379 = vmatpush2.msra.mxu0 %v896
    %2380 = vmatprep.subr.mxu0 %v895
    %2381 = vmatpush2.msra.mxu0 %v894
    %2382 = vmatprep.subr.mxu0 %v893
    %2383 = vmatpush2.msra.mxu0 %v892
    %2384 = vmatprep.subr.mxu0 %v891
    %2385 = vmatpush2.msra.mxu0 %v890
    %2386 = vmatprep.subr.mxu0 %v889
    %2387 = vmatpush2.msra.mxu0 %v888
    %2388 = vmatprep.subr.mxu0 %v887
    %2389 = vmatpush2.msra.mxu0 %v886
    %2390 = vmatprep.mubr.f32.mxu0 %v1403
    %2391 = vmatmul.mubr.f32.gmra.mxu0 %v1402
    %v2392 = vpop.f32.mrf.mxu0
    %v2393 = vadd.f32 %v2322, %v2392
    %v2394 = vpop.f32.mrf.mxu0
    %v2395 = vadd.f32 %v2324, %v2394
    %2396 = vdwg.mxu0
    %2397 = vmatprep.subr.mxu0 %v949
    %2398 = vmatpush1.msra.mxu0 %v948
    %2399 = vmatprep.subr.mxu0 %v947
    %2400 = vmatpush1.msra.mxu0 %v946
    %2401 = vmatprep.subr.mxu0 %v945
    %2402 = vmatpush1.msra.mxu0 %v944
    %2403 = vmatprep.subr.mxu0 %v943
    %2404 = vmatpush1.msra.mxu0 %v942
    %2405 = vmatprep.subr.mxu0 %v941
    %2406 = vmatpush1.msra.mxu0 %v940
    %2407 = vmatprep.subr.mxu0 %v939
    %2408 = vmatpush1.msra.mxu0 %v938
    %2409 = vmatprep.subr.mxu0 %v937
    %2410 = vmatpush1.msra.mxu0 %v936
    %2411 = vmatprep.subr.mxu0 %v935
    %2412 = vmatpush1.msra.mxu0 %v934
    %2413 = vmatprep.subr.mxu0 %v933
    %2414 = vmatpush1.msra.mxu0 %v932
    %2415 = vmatprep.subr.mxu0 %v931
    %2416 = vmatpush1.msra.mxu0 %v930
    %2417 = vmatprep.subr.mxu0 %v929
    %2418 = vmatpush1.msra.mxu0 %v928
    %2419 = vmatprep.subr.mxu0 %v927
    %2420 = vmatpush1.msra.mxu0 %v926
    %2421 = vmatprep.subr.mxu0 %v925
    %2422 = vmatpush1.msra.mxu0 %v924
    %2423 = vmatprep.subr.mxu0 %v923
    %2424 = vmatpush1.msra.mxu0 %v922
    %2425 = vmatprep.subr.mxu0 %v921
    %2426 = vmatpush1.msra.mxu0 %v920
    %2427 = vmatprep.subr.mxu0 %v919
    %2428 = vmatpush1.msra.mxu0 %v918
    %2429 = vmatprep.subr.mxu0 %v981
    %2430 = vmatpush2.msra.mxu0 %v980
    %2431 = vmatprep.subr.mxu0 %v979
    %2432 = vmatpush2.msra.mxu0 %v978
    %2433 = vmatprep.subr.mxu0 %v977
    %2434 = vmatpush2.msra.mxu0 %v976
    %2435 = vmatprep.subr.mxu0 %v975
    %2436 = vmatpush2.msra.mxu0 %v974
    %2437 = vmatprep.subr.mxu0 %v973
    %2438 = vmatpush2.msra.mxu0 %v972
    %2439 = vmatprep.subr.mxu0 %v971
    %2440 = vmatpush2.msra.mxu0 %v970
    %2441 = vmatprep.subr.mxu0 %v969
    %2442 = vmatpush2.msra.mxu0 %v968
    %2443 = vmatprep.subr.mxu0 %v967
    %2444 = vmatpush2.msra.mxu0 %v966
    %2445 = vmatprep.subr.mxu0 %v965
    %2446 = vmatpush2.msra.mxu0 %v964
    %2447 = vmatprep.subr.mxu0 %v963
    %2448 = vmatpush2.msra.mxu0 %v962
    %2449 = vmatprep.subr.mxu0 %v961
    %2450 = vmatpush2.msra.mxu0 %v960
    %2451 = vmatprep.subr.mxu0 %v959
    %2452 = vmatpush2.msra.mxu0 %v958
    %2453 = vmatprep.subr.mxu0 %v957
    %2454 = vmatpush2.msra.mxu0 %v956
    %2455 = vmatprep.subr.mxu0 %v955
    %2456 = vmatpush2.msra.mxu0 %v954
    %2457 = vmatprep.subr.mxu0 %v953
    %2458 = vmatpush2.msra.mxu0 %v952
    %2459 = vmatprep.subr.mxu0 %v951
    %2460 = vmatpush2.msra.mxu0 %v950
    %2461 = vmatprep.mubr.f32.mxu0 %v1405
    %2462 = vmatmul.mubr.f32.gmra.mxu0 %v1404
    %v2463 = vpop.f32.mrf.mxu0
    %v2464 = vadd.f32 %v2393, %v2463
    %v2465 = vpop.f32.mrf.mxu0
    %v2466 = vadd.f32 %v2395, %v2465
    %2467 = vdwg.mxu0
    %2468 = vmatprep.subr.mxu0 %v1013
    %2469 = vmatpush1.msra.mxu0 %v1012
    %2470 = vmatprep.subr.mxu0 %v1011
    %2471 = vmatpush1.msra.mxu0 %v1010
    %2472 = vmatprep.subr.mxu0 %v1009
    %2473 = vmatpush1.msra.mxu0 %v1008
    %2474 = vmatprep.subr.mxu0 %v1007
    %2475 = vmatpush1.msra.mxu0 %v1006
    %2476 = vmatprep.subr.mxu0 %v1005
    %2477 = vmatpush1.msra.mxu0 %v1004
    %2478 = vmatprep.subr.mxu0 %v1003
    %2479 = vmatpush1.msra.mxu0 %v1002
    %2480 = vmatprep.subr.mxu0 %v1001
    %2481 = vmatpush1.msra.mxu0 %v1000
    %2482 = vmatprep.subr.mxu0 %v999
    %2483 = vmatpush1.msra.mxu0 %v998
    %2484 = vmatprep.subr.mxu0 %v997
    %2485 = vmatpush1.msra.mxu0 %v996
    %2486 = vmatprep.subr.mxu0 %v995
    %2487 = vmatpush1.msra.mxu0 %v994
    %2488 = vmatprep.subr.mxu0 %v993
    %2489 = vmatpush1.msra.mxu0 %v992
    %2490 = vmatprep.subr.mxu0 %v991
    %2491 = vmatpush1.msra.mxu0 %v990
    %2492 = vmatprep.subr.mxu0 %v989
    %2493 = vmatpush1.msra.mxu0 %v988
    %2494 = vmatprep.subr.mxu0 %v987
    %2495 = vmatpush1.msra.mxu0 %v986
    %2496 = vmatprep.subr.mxu0 %v985
    %2497 = vmatpush1.msra.mxu0 %v984
    %2498 = vmatprep.subr.mxu0 %v983
    %2499 = vmatpush1.msra.mxu0 %v982
    %2500 = vmatprep.subr.mxu0 %v1045
    %2501 = vmatpush2.msra.mxu0 %v1044
    %2502 = vmatprep.subr.mxu0 %v1043
    %2503 = vmatpush2.msra.mxu0 %v1042
    %2504 = vmatprep.subr.mxu0 %v1041
    %2505 = vmatpush2.msra.mxu0 %v1040
    %2506 = vmatprep.subr.mxu0 %v1039
    %2507 = vmatpush2.msra.mxu0 %v1038
    %2508 = vmatprep.subr.mxu0 %v1037
    %2509 = vmatpush2.msra.mxu0 %v1036
    %2510 = vmatprep.subr.mxu0 %v1035
    %2511 = vmatpush2.msra.mxu0 %v1034
    %2512 = vmatprep.subr.mxu0 %v1033
    %2513 = vmatpush2.msra.mxu0 %v1032
    %2514 = vmatprep.subr.mxu0 %v1031
    %2515 = vmatpush2.msra.mxu0 %v1030
    %2516 = vmatprep.subr.mxu0 %v1029
    %2517 = vmatpush2.msra.mxu0 %v1028
    %2518 = vmatprep.subr.mxu0 %v1027
    %2519 = vmatpush2.msra.mxu0 %v1026
    %2520 = vmatprep.subr.mxu0 %v1025
    %2521 = vmatpush2.msra.mxu0 %v1024
    %2522 = vmatprep.subr.mxu0 %v1023
    %2523 = vmatpush2.msra.mxu0 %v1022
    %2524 = vmatprep.subr.mxu0 %v1021
    %2525 = vmatpush2.msra.mxu0 %v1020
    %2526 = vmatprep.subr.mxu0 %v1019
    %2527 = vmatpush2.msra.mxu0 %v1018
    %2528 = vmatprep.subr.mxu0 %v1017
    %2529 = vmatpush2.msra.mxu0 %v1016
    %2530 = vmatprep.subr.mxu0 %v1015
    %2531 = vmatpush2.msra.mxu0 %v1014
    %2532 = vmatprep.mubr.f32.mxu0 %v1439
    %2533 = vmatmul.mubr.f32.gmra.mxu0 %v1438
    %v2534 = vpop.f32.mrf.mxu0
    %v2535 = vadd.f32 %v2464, %v2534
    %v2536 = vpop.f32.mrf.mxu0
    %v2537 = vadd.f32 %v2466, %v2536
    %2538 = vdwg.mxu0
    %2539 = vmatprep.subr.mxu0 %v1077
    %2540 = vmatpush1.msra.mxu0 %v1076
    %2541 = vmatprep.subr.mxu0 %v1075
    %2542 = vmatpush1.msra.mxu0 %v1074
    %2543 = vmatprep.subr.mxu0 %v1073
    %2544 = vmatpush1.msra.mxu0 %v1072
    %2545 = vmatprep.subr.mxu0 %v1071
    %2546 = vmatpush1.msra.mxu0 %v1070
    %2547 = vmatprep.subr.mxu0 %v1069
    %2548 = vmatpush1.msra.mxu0 %v1068
    %2549 = vmatprep.subr.mxu0 %v1067
    %2550 = vmatpush1.msra.mxu0 %v1066
    %2551 = vmatprep.subr.mxu0 %v1065
    %2552 = vmatpush1.msra.mxu0 %v1064
    %2553 = vmatprep.subr.mxu0 %v1063
    %2554 = vmatpush1.msra.mxu0 %v1062
    %2555 = vmatprep.subr.mxu0 %v1061
    %2556 = vmatpush1.msra.mxu0 %v1060
    %2557 = vmatprep.subr.mxu0 %v1059
    %2558 = vmatpush1.msra.mxu0 %v1058
    %2559 = vmatprep.subr.mxu0 %v1057
    %2560 = vmatpush1.msra.mxu0 %v1056
    %2561 = vmatprep.subr.mxu0 %v1055
    %2562 = vmatpush1.msra.mxu0 %v1054
    %2563 = vmatprep.subr.mxu0 %v1053
    %2564 = vmatpush1.msra.mxu0 %v1052
    %2565 = vmatprep.subr.mxu0 %v1051
    %2566 = vmatpush1.msra.mxu0 %v1050
    %2567 = vmatprep.subr.mxu0 %v1049
    %2568 = vmatpush1.msra.mxu0 %v1048
    %2569 = vmatprep.subr.mxu0 %v1047
    %2570 = vmatpush1.msra.mxu0 %v1046
    %2571 = vmatprep.subr.mxu0 %v1109
    %2572 = vmatpush2.msra.mxu0 %v1108
    %2573 = vmatprep.subr.mxu0 %v1107
    %2574 = vmatpush2.msra.mxu0 %v1106
    %2575 = vmatprep.subr.mxu0 %v1105
    %2576 = vmatpush2.msra.mxu0 %v1104
    %2577 = vmatprep.subr.mxu0 %v1103
    %2578 = vmatpush2.msra.mxu0 %v1102
    %2579 = vmatprep.subr.mxu0 %v1101
    %2580 = vmatpush2.msra.mxu0 %v1100
    %2581 = vmatprep.subr.mxu0 %v1099
    %2582 = vmatpush2.msra.mxu0 %v1098
    %2583 = vmatprep.subr.mxu0 %v1097
    %2584 = vmatpush2.msra.mxu0 %v1096
    %2585 = vmatprep.subr.mxu0 %v1095
    %2586 = vmatpush2.msra.mxu0 %v1094
    %2587 = vmatprep.subr.mxu0 %v1093
    %2588 = vmatpush2.msra.mxu0 %v1092
    %2589 = vmatprep.subr.mxu0 %v1091
    %2590 = vmatpush2.msra.mxu0 %v1090
    %2591 = vmatprep.subr.mxu0 %v1089
    %2592 = vmatpush2.msra.mxu0 %v1088
    %2593 = vmatprep.subr.mxu0 %v1087
    %2594 = vmatpush2.msra.mxu0 %v1086
    %2595 = vmatprep.subr.mxu0 %v1085
    %2596 = vmatpush2.msra.mxu0 %v1084
    %2597 = vmatprep.subr.mxu0 %v1083
    %2598 = vmatpush2.msra.mxu0 %v1082
    %2599 = vmatprep.subr.mxu0 %v1081
    %2600 = vmatpush2.msra.mxu0 %v1080
    %2601 = vmatprep.subr.mxu0 %v1079
    %2602 = vmatpush2.msra.mxu0 %v1078
    %2603 = vmatprep.mubr.f32.mxu0 %v1441
    %2604 = vmatmul.mubr.f32.gmra.mxu0 %v1440
    %v2605 = vpop.f32.mrf.mxu0
    %v2606 = vadd.f32 %v2535, %v2605
    %v2607 = vpop.f32.mrf.mxu0
    %v2608 = vadd.f32 %v2537, %v2607
    %2609 = vdwg.mxu0
    %vm2610 = vcmp.gt.f32.partialorder %v2606, 0.0
    %vm2611 = vcmp.gt.f32.partialorder %v2608, 0.0
    %v2612 = vmul.f32 %v2606, 0.01
    %v2613 = vmul.f32 %v2608, 0.01
    %v2614 = vsel %vm2610, %v2606, %v2612
    %v2615 = vsel %vm2611, %v2608, %v2613
    %v2616 = vsub.f32 %v2614, %v2615
    %v2617 = vmul.f32 %v2616, 1.442695
    %v2618 = vpow.pop %v2617
    %v2619 = vadd.f32 %v2618, 1.0
    %v2620 = vrcp.pop %v2619
    %v2621 = vmul.f32 1.0, %v2620
    %v2623 = vcombine.high %v2621, %v2621
    %v2625 = vunpack.c.l.s4 1983009808
    %v2626 = vunpack.c.0.s8 %v2625
    %v2627 = vlaneseq
    %v2628 = vshrl.u32 %v2627, 7
    %v2629 = vsub.s32 %v2626, %v2628
    %v2630 = vrot.slane %v2621, %v2629
    %v2632 = vunpack.c.l.s4 1983009808
    %v2633 = vunpack.c.0.s8 %v2632
    %v2634 = vlaneseq
    %v2635 = vshrl.u32 %v2634, 7
    %v2636 = vsub.s32 %v2633, %v2635
    %v2637 = vrot.slane %v2623, %v2636
    %v2638 = vcombine.high %v2630, %v2630
    %v2639 = vcombine.high %v2637, %v2637
    %2644 = vst [vmem:[#allocation8 + $0x2] sm:$0x3] %v2630
    %2645 = vst [vmem:[#allocation8 + $0x6] sm:$0x3] %v2638
    %2646 = vst [vmem:[#allocation8 + $0xa] sm:$0x3] %v2637
    %2647 = vst [vmem:[#allocation8 + $0xe] sm:$0x3] %v2639
    %v2648 = vsub.f32 1.0, %v2621
    %v2650 = vcombine.high %v2648, %v2648
    %v2652 = vunpack.c.l.s4 1983009808
    %v2653 = vunpack.c.0.s8 %v2652
    %v2654 = vlaneseq
    %v2655 = vshrl.u32 %v2654, 7
    %v2656 = vsub.s32 %v2653, %v2655
    %v2657 = vrot.slane %v2648, %v2656
    %v2659 = vunpack.c.l.s4 1983009808
    %v2660 = vunpack.c.0.s8 %v2659
    %v2661 = vlaneseq
    %v2662 = vshrl.u32 %v2661, 7
    %v2663 = vsub.s32 %v2660, %v2662
    %v2664 = vrot.slane %v2650, %v2663
    %v2665 = vcombine.high %v2657, %v2657
    %v2666 = vcombine.high %v2664, %v2664
    %2671 = vst [vmem:[#allocation8] sm:$0x3] %v2657
    %2672 = vst [vmem:[#allocation8 + $0x4] sm:$0x3] %v2665
    %2673 = vst [vmem:[#allocation8 + $0x8] sm:$0x3] %v2664
    %2674 = vst [vmem:[#allocation8 + $0xc] sm:$0x3] %v2666
    // Predicated region
    $region26: #{tpu_custom_call.1} parent=1 // pred_check
      _
    $region27: #{tpu_custom_call.1} parent=1 // pred_check_branch
      %2676 = sbr.rel (0) target = $region29
    $region28: #{tpu_custom_call.1} parent=1 // pred_region
      %s2678 = ssub.s32 256, 64
      %2679 = vsyncadd [#allocation4], %s2678
      %s2680 = sshll.u32 [#allocation8], 4
      %s2681 = int_to_ptr.vmem [resolvable:$true] %s2680
      %2686 = dma.vmem_to_hbm [thread:$0]  %s2681, 64, %s3, [#allocation4], 64, 64, 4
    $region29: #{tpu_custom_call.1} parent=1 // pred_fallthru
      _
    // Predicated region
    $region30: #{tpu_custom_call.1} parent=1 // pred_check
      _
    $region31: #{tpu_custom_call.1} parent=1 // pred_check_branch
      %2688 = sbr.rel (0) target = $region33
    $region32: #{tpu_custom_call.1} parent=1 // pred_region
      %2689 = dma.done [#allocation4], 256
    $region33: #{tpu_custom_call.1} parent=1 // pred_fallthru
      _
    %2690 = vsyncpa [#allocation3], 1
    %2691 = vsyncpa [#allocation6], 1
    %2692 = vsyncpa [#allocation4], 1

</llo_original>
